<compile_context>
chip_gen: v5e
topology: v5e:2x2
jax: 0.10.0
libtpu: 0.0.40
codegen_flags: <defaults>
</compile_context>

<pallas_src>
import math

import jax
import jax.numpy as jnp
import numpy as np
from jax.experimental import pallas as pl
from jax.experimental.pallas import tpu as pltpu

# ----------------------------- configuration --------------------------------
B = 2        # batch
N = 8        # input sequence length
D = 16       # input_size
H = 32       # hidden_size
DFF = 64     # dim_feedforward
L = 2        # num_layers
NH = 2       # num_head
HD = H // NH
NC = 3       # num_classes
CIN = 4      # num_conditions
CH = 32      # c_hidden_size
S = N + 1    # sequence length incl. CLS token (true length)
SP = ((S + 7) // 8) * 8   # sequence padded to a sublane multiple (=16)
BSP = B * SP              # stacked activation rows (=32)
EPS = 1e-5
NEG = -1e9   # additive mask value for padded keys
OUTW = 8     # packed output lane width: [reg | cls2(3) | cls(3) | pad]
SLAB_W = 64  # lane width of the weight slabs (>= max matrix column count)


# --------------------------- static slab layout ------------------------------
def _build_layout():
    wtab, vtab = {}, {}
    wrow, vrow = 0, 0

    def addw(name, r, c):
        nonlocal wrow
        wtab[name] = (wrow, r, c)
        wrow += r + ((-r) % 8)          # keep every matrix 8-row aligned

    def addv(name, c):
        nonlocal vrow
        vtab[name] = (vrow, c)          # one vector per row
        vrow += 1

    addw("emb_w", D, H)
    addw("embb", BSP, H)                # per-row embedding bias (0 on CLS/pad rows)
    for l in range(L):
        for h in range(NH):
            addw(f"wq_{l}_{h}", H, HD); addv(f"bq_{l}_{h}", HD)
            addw(f"wk_{l}_{h}", H, HD); addv(f"bk_{l}_{h}", HD)
            addw(f"wv_{l}_{h}", H, HD); addv(f"bv_{l}_{h}", HD)
            addw(f"ow_{l}_{h}", HD, H)
        addv(f"ob_{l}", H)
        addv(f"ln1w_{l}", H); addv(f"ln1b_{l}", H)
        addv(f"ln2w_{l}", H); addv(f"ln2b_{l}", H)
        addw(f"f1w_{l}", H, DFF); addv(f"f1b_{l}", DFF)
        addw(f"f2w_{l}", DFF, H); addv(f"f2b_{l}", H)
    addw("condw", CIN, CH); addv("condb", CH)
    addw("catw", CH + H, H); addv("catb", H)
    addw("r1w", H, H // 2);  addv("r1b", H // 2)
    addw("r2w", H // 2, 1);  addv("r2b", 1)
    addw("clsw2", H, 2 * NC); addv("clsb2", 2 * NC)

    return wtab, vtab, wrow + ((-wrow) % 8), vrow + ((-vrow) % 8)


WTAB, VTAB, WROWS, VROWS = _build_layout()


def _layernorm(y, w, b):
    mu = jnp.mean(y, axis=-1, keepdims=True)
    var = jnp.mean((y - mu) ** 2, axis=-1, keepdims=True)
    return (y - mu) * jax.lax.rsqrt(var + EPS) * w + b


# ------------------------------ Pallas kernel --------------------------------
def hybrid_kernel(x_ref, bias_ref, c_ref, w_ref, v_ref, out_ref):
    f32 = jnp.float32

    def W(name):
        r0, r, c = WTAB[name]
        return w_ref[r0:r0 + r, 0:c]            # static, 8-row aligned slice

    vv = v_ref[...]                              # (VROWS, SLAB_W) loaded once

    def V(name):
        r0, c = VTAB[name]
        return vv[r0:r0 + 1, 0:c]                # (1, c) row view

    # ---- embedding on the zero-padded (B*SP, D) input stack -----------------
    # CLS rows stay exactly zero (cls_token parameter) because the per-row
    # embedding bias slab "embb" is zero on CLS / structural-pad rows.
    xs = jnp.dot(x_ref[...], W("emb_w"), preferred_element_type=f32) + W("embb")

    # key-padding bias, pre-broadcast in the wrapper, hoisted out of the loops
    bias_b = [bias_ref[b] for b in range(B)]     # each (SP, SP)

    # ---- TransformerEncoder (post-norm, ReLU FFN, key-padding mask) ---------
    for l in range(L):
        attn = jnp.zeros((BSP, H), f32) + V(f"ob_{l}")
        for h in range(NH):
            # per-head projections: no lane-offset slicing of activations;
            # 1/sqrt(HD) is folded into wq/bq at param-prep time.
            q = jnp.dot(xs, W(f"wq_{l}_{h}"), preferred_element_type=f32) + V(f"bq_{l}_{h}")
            k = jnp.dot(xs, W(f"wk_{l}_{h}"), preferred_element_type=f32) + V(f"bk_{l}_{h}")
            v = jnp.dot(xs, W(f"wv_{l}_{h}"), preferred_element_type=f32) + V(f"bv_{l}_{h}")
            o_rows = []
            for b in range(B):
                sl = slice(b * SP, (b + 1) * SP)          # 8-aligned row block
                sc = jax.lax.dot_general(
                    q[sl], k[sl], (((1,), (1,)), ((), ())),
                    preferred_element_type=f32) + bias_b[b]          # (SP, SP)
                sc = sc - jnp.max(sc, axis=-1, keepdims=True)
                p = jnp.exp(sc)
                p = p * pl.reciprocal(jnp.sum(p, axis=-1, keepdims=True), approx=True)
                o_rows.append(jnp.dot(p, v[sl], preferred_element_type=f32))  # (SP, HD)
            o_h = jnp.concatenate(o_rows, axis=0)                    # (BSP, HD)
            # per-head out-proj slab summed -> no head concat
            attn = attn + jnp.dot(o_h, W(f"ow_{l}_{h}"), preferred_element_type=f32)

        y = _layernorm(xs + attn, V(f"ln1w_{l}"), V(f"ln1b_{l}"))
        ff = jnp.maximum(
            jnp.dot(y, W(f"f1w_{l}"), preferred_element_type=f32) + V(f"f1b_{l}"), 0.0)
        ff = jnp.dot(ff, W(f"f2w_{l}"), preferred_element_type=f32) + V(f"f2b_{l}")
        xs = _layernorm(y + ff, V(f"ln2w_{l}"), V(f"ln2b_{l}"))

    # ---- heads: fc_condition / fc_concat / regression / classification ------
    cls = jnp.concatenate([xs[b * SP:b * SP + 1, :] for b in range(B)], axis=0)  # (B, H)
    cond = jnp.dot(c_ref[...], W("condw"), preferred_element_type=f32) + V("condb")
    hin = jnp.concatenate([cond, cls], axis=-1)                                  # (B, CH+H)
    hcat = jnp.maximum(
        jnp.dot(hin, W("catw"), preferred_element_type=f32) + V("catb"), 0.0)    # (B, H)
    r = jnp.maximum(
        jnp.dot(hcat, W("r1w"), preferred_element_type=f32) + V("r1b"), 0.0)
    reg = jnp.dot(r, W("r2w"), preferred_element_type=f32) + V("r2b")            # (B, 1)
    co = jnp.dot(hcat, W("clsw2"), preferred_element_type=f32) + V("clsb2")      # (B, 2NC)

    # single lane-packed store: [reg | cls2 | cls | pad]
    out_ref[...] = jnp.concatenate(
        [reg, co, jnp.zeros((B, OUTW - 1 - 2 * NC), f32)], axis=-1)


# --------------------------- parameter construction --------------------------
def make_params(key):
    """PyTorch-shaped parameters, deterministically initialized."""
    ks = jax.random.split(key, 26)

    def init(k, shape, scale=0.1):
        return jax.random.normal(k, shape, jnp.float32) * scale

    p = {}
    p["emb_w"] = init(ks[0], (H, D));            p["emb_b"] = init(ks[1], (H,))
    p["in_proj_w"] = init(ks[2], (L, 3 * H, H)); p["in_proj_b"] = init(ks[3], (L, 3 * H))
    p["out_w"] = init(ks[4], (L, H, H));         p["out_b"] = init(ks[5], (L, H))
    p["ln1_w"] = 1.0 + init(ks[6], (L, H));      p["ln1_b"] = init(ks[7], (L, H))
    p["ln2_w"] = 1.0 + init(ks[8], (L, H));      p["ln2_b"] = init(ks[9], (L, H))
    p["f1_w"] = init(ks[10], (L, DFF, H));       p["f1_b"] = init(ks[11], (L, DFF))
    p["f2_w"] = init(ks[12], (L, H, DFF));       p["f2_b"] = init(ks[13], (L, H))
    p["cond_w"] = init(ks[14], (CH, CIN));       p["cond_b"] = init(ks[15], (CH,))
    p["cat_w"] = init(ks[16], (H, H + CH));      p["cat_b"] = init(ks[17], (H,))
    p["r1_w"] = init(ks[18], (H // 2, H));       p["r1_b"] = init(ks[19], (H // 2,))
    p["r2_w"] = init(ks[20], (1, H // 2));       p["r2_b"] = init(ks[21], (1,))
    p["cls_w"] = init(ks[22], (NC, H));          p["cls_b"] = init(ks[23], (NC,))
    p["cls2_w"] = init(ks[24], (NC, H));         p["cls2_b"] = init(ks[25], (NC,))
    # cls_token is nn.Parameter(torch.zeros(1,1,H)) -> kept exactly zero in-kernel.
    return p


def kernel_params(p):
    """Pack torch-shaped params into two lane-aligned VMEM slabs (done ONCE)."""
    scale = 1.0 / math.sqrt(HD)
    wslab = np.zeros((WROWS, SLAB_W), np.float32)
    vslab = np.zeros((VROWS, SLAB_W), np.float32)

    def putw(name, mat):
        r0, r, c = WTAB[name]
        mat = np.asarray(mat, np.float32)
        assert mat.shape == (r, c), (name, mat.shape, (r, c))
        wslab[r0:r0 + r, 0:c] = mat

    def putv(name, vec):
        r0, c = VTAB[name]
        vec = np.asarray(vec, np.float32).reshape(-1)
        assert vec.shape == (c,), (name, vec.shape, c)
        vslab[r0, 0:c] = vec

    putw("emb_w", np.asarray(p["emb_w"]).T)                       # (D, H)
    embb = np.zeros((BSP, H), np.float32)
    for b in range(B):
        embb[b * SP + 1: b * SP + 1 + N, :] = np.asarray(p["emb_b"])
    putw("embb", embb)

    for l in range(L):
        win = np.asarray(p["in_proj_w"][l])                       # (3H, H)
        bin_ = np.asarray(p["in_proj_b"][l])                      # (3H,)
        wout = np.asarray(p["out_w"][l])                          # (H, H)
        for h in range(NH):
            s0, s1 = h * HD, (h + 1) * HD
            putw(f"wq_{l}_{h}", win[0 * H + s0:0 * H + s1, :].T * scale)
            putv(f"bq_{l}_{h}", bin_[0 * H + s0:0 * H + s1] * scale)
            putw(f"wk_{l}_{h}", win[1 * H + s0:1 * H + s1, :].T)
            putv(f"bk_{l}_{h}", bin_[1 * H + s0:1 * H + s1])
            putw(f"wv_{l}_{h}", win[2 * H + s0:2 * H + s1, :].T)
            putv(f"bv_{l}_{h}", bin_[2 * H + s0:2 * H + s1])
            putw(f"ow_{l}_{h}", wout[:, s0:s1].T)                 # (HD, H)
        putv(f"ob_{l}", p["out_b"][l])
        putv(f"ln1w_{l}", p["ln1_w"][l]); putv(f"ln1b_{l}", p["ln1_b"][l])
        putv(f"ln2w_{l}", p["ln2_w"][l]); putv(f"ln2b_{l}", p["ln2_b"][l])
        putw(f"f1w_{l}", np.asarray(p["f1_w"][l]).T); putv(f"f1b_{l}", p["f1_b"][l])
        putw(f"f2w_{l}", np.asarray(p["f2_w"][l]).T); putv(f"f2b_{l}", p["f2_b"][l])

    putw("condw", np.asarray(p["cond_w"]).T);  putv("condb", p["cond_b"])
    putw("catw", np.asarray(p["cat_w"]).T);    putv("catb", p["cat_b"])
    putw("r1w", np.asarray(p["r1_w"]).T);      putv("r1b", p["r1_b"])
    putw("r2w", np.asarray(p["r2_w"]).T);      putv("r2b", p["r2_b"])
    putw("clsw2", np.concatenate([np.asarray(p["cls2_w"]).T,
                                  np.asarray(p["cls_w"]).T], axis=1))
    putv("clsb2", np.concatenate([np.asarray(p["cls2_b"]),
                                  np.asarray(p["cls_b"])]))
    return jnp.asarray(wslab), jnp.asarray(vslab)


# ------------------------------- wrapper -------------------------------------
@jax.jit
def hybrid_forward(x, c_inputs, mask, wslab, vslab):
    # zero-padded token stack: per batch block = [CLS(0) | tokens | pad(0)]
    xp = jnp.zeros((B, SP, D), jnp.float32).at[:, 1:1 + N, :].set(x).reshape(BSP, D)
    # additive key bias: 0 for CLS + valid tokens, NEG for masked + structural pad
    key_bias = jnp.full((B, SP), NEG, jnp.float32)
    key_bias = key_bias.at[:, 0].set(0.0)
    key_bias = key_bias.at[:, 1:1 + N].set(jnp.where(mask, NEG, 0.0))
    bias3 = jnp.broadcast_to(key_bias[:, None, :], (B, SP, SP))

    vmem = pl.BlockSpec(memory_space=pltpu.MemorySpace.VMEM)
    out = pl.pallas_call(
        hybrid_kernel,
        out_shape=jax.ShapeDtypeStruct((B, OUTW), jnp.float32),
        in_specs=[vmem] * 5,
        out_specs=vmem,
    )(xp, bias3, c_inputs, wslab, vslab)

    return out[:, 0:1], out[:, 1:1 + NC], out[:, 1 + NC:1 + 2 * NC]


# ------------------------- plain-JAX reference (check) ------------------------
def reference(x, c, mask, p):
    def ln(y, w, b):
        mu = y.mean(-1, keepdims=True)
        var = ((y - mu) ** 2).mean(-1, keepdims=True)
        return (y - mu) * jax.lax.rsqrt(var + EPS) * w + b

    with jax.default_matmul_precision("highest"):
        emb = jnp.einsum("bnd,hd->bnh", x, p["emb_w"]) + p["emb_b"]
        xs = jnp.concatenate([jnp.zeros((B, 1, H), jnp.float32), emb], axis=1)
        mfull = jnp.concatenate([jnp.zeros((B, 1), bool), mask], axis=1)
        bias = jnp.where(mfull, NEG, 0.0)[:, None, None, :]
        for l in range(L):
            qkv = jnp.einsum("bsh,oh->bso", xs, p["in_proj_w"][l]) + p["in_proj_b"][l]
            q, k, v = jnp.split(qkv, 3, axis=-1)
            hsplit = lambda t: t.reshape(B, S, NH, HD).transpose(0, 2, 1, 3)
            q, k, v = hsplit(q), hsplit(k), hsplit(v)
            sc = jnp.einsum("bhqd,bhkd->bhqk", q, k) / math.sqrt(HD) + bias
            pa = jax.nn.softmax(sc, axis=-1)
            o = jnp.einsum("bhqk,bhkd->bhqd", pa, v).transpose(0, 2, 1, 3).reshape(B, S, H)
            ao = jnp.einsum("bsh,oh->bso", o, p["out_w"][l]) + p["out_b"][l]
            y = ln(xs + ao, p["ln1_w"][l], p["ln1_b"][l])
            ff = jax.nn.relu(jnp.einsum("bsh,fh->bsf", y, p["f1_w"][l]) + p["f1_b"][l])
            ff = jnp.einsum("bsf,hf->bsh", ff, p["f2_w"][l]) + p["f2_b"][l]
            xs = ln(y + ff, p["ln2_w"][l], p["ln2_b"][l])
        cls = xs[:, 0, :]
        cond = c @ p["cond_w"].T + p["cond_b"]
        hcat = jax.nn.relu(
            jnp.concatenate([cond, cls], -1) @ p["cat_w"].T + p["cat_b"])
        reg = jax.nn.relu(hcat @ p["r1_w"].T + p["r1_b"]) @ p["r2_w"].T + p["r2_b"]
        out2 = hcat @ p["cls2_w"].T + p["cls2_b"]
        outc = hcat @ p["cls_w"].T + p["cls_b"]
    return reg, out2, outc


# ---------------------------------- main --------------------------------------
if __name__ == "__main__":
    key = jax.random.PRNGKey(0)
    kx, kc, kw = jax.random.split(key, 3)
    x = jax.random.normal(kx, (B, N, D), jnp.float32)
    c_inputs = jax.random.normal(kc, (B, CIN), jnp.float32)
    valid_len = jnp.array([8, 5])
    mask = jnp.arange(N)[None, :] >= valid_len[:, None]   # True = padding (B, N)

    params = make_params(kw)
    wslab, vslab = kernel_params(params)     # one-time slab packing (host side)

    outs = hybrid_forward(x, c_inputs, mask, wslab, vslab)
    outs = jax.block_until_ready(outs)

    refs = reference(x, c_inputs, mask, params)
    # kernel runs at default (fast) MXU precision + approx softmax reciprocal;
    # the reference runs at f32-highest, so compare at 1e-2.
    for a, r in zip(outs, refs):
        np.testing.assert_allclose(np.asarray(a), np.asarray(r), rtol=1e-2, atol=1e-2)

    print("KERNEL_OK")
</pallas_src>

<mosaic_0001>
module attributes {stable_mosaic.version = 11 : i64} {
  func.func @hybrid_kernel(%arg0: memref<32x16xf32, #tpu.memory_space<vmem>>, %arg1: memref<2x16x16xf32, #tpu.memory_space<vmem>>, %arg2: memref<2x4xf32, #tpu.memory_space<vmem>>, %arg3: memref<840x64xf32, #tpu.memory_space<vmem>>, %arg4: memref<32x64xf32, #tpu.memory_space<vmem>>, %arg5: memref<2x8xf32, #tpu.memory_space<vmem>>) attributes {dimension_semantics = [], scalar_prefetch = 0 : i64, scratch_operands = 0 : i64, tpu.core_type = #tpu.core_type<tc>} {
    %c0 = arith.constant 0 : index
    %c0_0 = arith.constant 0 : index
    %0 = vector.load %arg4[%c0, %c0_0] : memref<32x64xf32, #tpu.memory_space<vmem>>, vector<32x64xf32>
    %c0_1 = arith.constant 0 : index
    %c0_2 = arith.constant 0 : index
    %1 = vector.load %arg0[%c0_1, %c0_2] : memref<32x16xf32, #tpu.memory_space<vmem>>, vector<32x16xf32>
    %c0_3 = arith.constant 0 : index
    %c0_4 = arith.constant 0 : index
    %2 = vector.load %arg3[%c0_3, %c0_4] : memref<840x64xf32, #tpu.memory_space<vmem>>, vector<16x32xf32>
    %cst = arith.constant dense<0.000000e+00> : vector<32x32xf32>
    %3 = tpu.matmul %1, %2, %cst {dimension_numbers = #tpu.dot_dimension_numbers<[1], [0], [0], [1], [0, 0, 1, 1], [], []>} : vector<32x16xf32>, vector<16x32xf32>, vector<32x32xf32> -> vector<32x32xf32>
    %c16 = arith.constant 16 : index
    %c0_5 = arith.constant 0 : index
    %4 = vector.load %arg3[%c16, %c0_5] : memref<840x64xf32, #tpu.memory_space<vmem>>, vector<32x32xf32>
    %5 = arith.addf %3, %4 : vector<32x32xf32>
    %c0_6 = arith.constant 0 : index
    %c0_7 = arith.constant 0 : index
    %c0_8 = arith.constant 0 : index
    %6 = vector.load %arg1[%c0_6, %c0_7, %c0_8] : memref<2x16x16xf32, #tpu.memory_space<vmem>>, vector<1x16x16xf32>
    %7 = vector.shape_cast %6 : vector<1x16x16xf32> to vector<16x16xf32>
    %c1 = arith.constant 1 : index
    %c0_9 = arith.constant 0 : index
    %c0_10 = arith.constant 0 : index
    %8 = vector.load %arg1[%c1, %c0_9, %c0_10] : memref<2x16x16xf32, #tpu.memory_space<vmem>>, vector<1x16x16xf32>
    %9 = vector.shape_cast %8 : vector<1x16x16xf32> to vector<16x16xf32>
    %cst_11 = arith.constant 0.000000e+00 : f32
    %10 = vector.broadcast %cst_11 : f32 to vector<32x32xf32>
    %11 = vector.extract_strided_slice %0 {offsets = [6, 0], sizes = [1, 32], strides = [1, 1]} : vector<32x64xf32> to vector<1x32xf32>
    %12 = vector.broadcast %11 : vector<1x32xf32> to vector<32x32xf32>
    %13 = arith.addf %10, %12 : vector<32x32xf32>
    %c48 = arith.constant 48 : index
    %c0_12 = arith.constant 0 : index
    %14 = vector.load %arg3[%c48, %c0_12] : memref<840x64xf32, #tpu.memory_space<vmem>>, vector<32x16xf32>
    %cst_13 = arith.constant dense<0.000000e+00> : vector<32x16xf32>
    %15 = tpu.matmul %5, %14, %cst_13 {dimension_numbers = #tpu.dot_dimension_numbers<[1], [0], [0], [1], [0, 0, 1, 1], [], []>} : vector<32x32xf32>, vector<32x16xf32>, vector<32x16xf32> -> vector<32x16xf32>
    %16 = vector.extract_strided_slice %0 {offsets = [0, 0], sizes = [1, 16], strides = [1, 1]} : vector<32x64xf32> to vector<1x16xf32>
    %17 = vector.broadcast %16 : vector<1x16xf32> to vector<32x16xf32>
    %18 = arith.addf %15, %17 : vector<32x16xf32>
    %c80 = arith.constant 80 : index
    %c0_14 = arith.constant 0 : index
    %19 = vector.load %arg3[%c80, %c0_14] : memref<840x64xf32, #tpu.memory_space<vmem>>, vector<32x16xf32>
    %cst_15 = arith.constant dense<0.000000e+00> : vector<32x16xf32>
    %20 = tpu.matmul %5, %19, %cst_15 {dimension_numbers = #tpu.dot_dimension_numbers<[1], [0], [0], [1], [0, 0, 1, 1], [], []>} : vector<32x32xf32>, vector<32x16xf32>, vector<32x16xf32> -> vector<32x16xf32>
    %21 = vector.extract_strided_slice %0 {offsets = [1, 0], sizes = [1, 16], strides = [1, 1]} : vector<32x64xf32> to vector<1x16xf32>
    %22 = vector.broadcast %21 : vector<1x16xf32> to vector<32x16xf32>
    %23 = arith.addf %20, %22 : vector<32x16xf32>
    %c112 = arith.constant 112 : index
    %c0_16 = arith.constant 0 : index
    %24 = vector.load %arg3[%c112, %c0_16] : memref<840x64xf32, #tpu.memory_space<vmem>>, vector<32x16xf32>
    %cst_17 = arith.constant dense<0.000000e+00> : vector<32x16xf32>
    %25 = tpu.matmul %5, %24, %cst_17 {dimension_numbers = #tpu.dot_dimension_numbers<[1], [0], [0], [1], [0, 0, 1, 1], [], []>} : vector<32x32xf32>, vector<32x16xf32>, vector<32x16xf32> -> vector<32x16xf32>
    %26 = vector.extract_strided_slice %0 {offsets = [2, 0], sizes = [1, 16], strides = [1, 1]} : vector<32x64xf32> to vector<1x16xf32>
    %27 = vector.broadcast %26 : vector<1x16xf32> to vector<32x16xf32>
    %28 = arith.addf %25, %27 : vector<32x16xf32>
    %29 = vector.extract_strided_slice %18 {offsets = [0, 0], sizes = [16, 16], strides = [1, 1]} : vector<32x16xf32> to vector<16x16xf32>
    %30 = vector.extract_strided_slice %23 {offsets = [0, 0], sizes = [16, 16], strides = [1, 1]} : vector<32x16xf32> to vector<16x16xf32>
    %cst_18 = arith.constant dense<0.000000e+00> : vector<16x16xf32>
    %31 = tpu.matmul %29, %30, %cst_18 {dimension_numbers = #tpu.dot_dimension_numbers<[1], [1], [0], [0], [0, 0, 1, 0], [], []>} : vector<16x16xf32>, vector<16x16xf32>, vector<16x16xf32> -> vector<16x16xf32>
    %32 = arith.addf %31, %7 : vector<16x16xf32>
    %cst_19 = arith.constant dense<0xFF800000> : vector<16xf32>
    %33 = vector.multi_reduction <maximumf>, %32, %cst_19 [1] : vector<16x16xf32> to vector<16xf32>
    %34 = vector.shape_cast %33 : vector<16xf32> to vector<16x1xf32>
    %35 = vector.broadcast %34 : vector<16x1xf32> to vector<16x16xf32>
    %36 = arith.subf %32, %35 : vector<16x16xf32>
    %37 = math.exp %36 : vector<16x16xf32>
    %cst_20 = arith.constant dense<0.000000e+00> : vector<16xf32>
    %38 = vector.multi_reduction <add>, %37, %cst_20 [1] : vector<16x16xf32> to vector<16xf32>
    %39 = vector.shape_cast %38 : vector<16xf32> to vector<16x1xf32>
    %40 = tpu.reciprocal %39 {approx = true} : vector<16x1xf32> -> vector<16x1xf32>
    %41 = vector.broadcast %40 : vector<16x1xf32> to vector<16x16xf32>
    %42 = arith.mulf %37, %41 : vector<16x16xf32>
    %43 = vector.extract_strided_slice %28 {offsets = [0, 0], sizes = [16, 16], strides = [1, 1]} : vector<32x16xf32> to vector<16x16xf32>
    %cst_21 = arith.constant dense<0.000000e+00> : vector<16x16xf32>
    %44 = tpu.matmul %42, %43, %cst_21 {dimension_numbers = #tpu.dot_dimension_numbers<[1], [0], [0], [1], [0, 0, 1, 1], [], []>} : vector<16x16xf32>, vector<16x16xf32>, vector<16x16xf32> -> vector<16x16xf32>
    %45 = vector.extract_strided_slice %18 {offsets = [16, 0], sizes = [16, 16], strides = [1, 1]} : vector<32x16xf32> to vector<16x16xf32>
    %46 = vector.extract_strided_slice %23 {offsets = [16, 0], sizes = [16, 16], strides = [1, 1]} : vector<32x16xf32> to vector<16x16xf32>
    %cst_22 = arith.constant dense<0.000000e+00> : vector<16x16xf32>
    %47 = tpu.matmul %45, %46, %cst_22 {dimension_numbers = #tpu.dot_dimension_numbers<[1], [1], [0], [0], [0, 0, 1, 0], [], []>} : vector<16x16xf32>, vector<16x16xf32>, vector<16x16xf32> -> vector<16x16xf32>
    %48 = arith.addf %47, %9 : vector<16x16xf32>
    %cst_23 = arith.constant dense<0xFF800000> : vector<16xf32>
    %49 = vector.multi_reduction <maximumf>, %48, %cst_23 [1] : vector<16x16xf32> to vector<16xf32>
    %50 = vector.shape_cast %49 : vector<16xf32> to vector<16x1xf32>
    %51 = vector.broadcast %50 : vector<16x1xf32> to vector<16x16xf32>
    %52 = arith.subf %48, %51 : vector<16x16xf32>
    %53 = math.exp %52 : vector<16x16xf32>
    %cst_24 = arith.constant dense<0.000000e+00> : vector<16xf32>
    %54 = vector.multi_reduction <add>, %53, %cst_24 [1] : vector<16x16xf32> to vector<16xf32>
    %55 = vector.shape_cast %54 : vector<16xf32> to vector<16x1xf32>
    %56 = tpu.reciprocal %55 {approx = true} : vector<16x1xf32> -> vector<16x1xf32>
    %57 = vector.broadcast %56 : vector<16x1xf32> to vector<16x16xf32>
    %58 = arith.mulf %53, %57 : vector<16x16xf32>
    %59 = vector.extract_strided_slice %28 {offsets = [16, 0], sizes = [16, 16], strides = [1, 1]} : vector<32x16xf32> to vector<16x16xf32>
    %cst_25 = arith.constant dense<0.000000e+00> : vector<16x16xf32>
    %60 = tpu.matmul %58, %59, %cst_25 {dimension_numbers = #tpu.dot_dimension_numbers<[1], [0], [0], [1], [0, 0, 1, 1], [], []>} : vector<16x16xf32>, vector<16x16xf32>, vector<16x16xf32> -> vector<16x16xf32>
    %61 = tpu.concatenate %44, %60 in 0 : vector<16x16xf32>, vector<16x16xf32> -> vector<32x16xf32>
    %c144 = arith.constant 144 : index
    %c0_26 = arith.constant 0 : index
    %62 = vector.load %arg3[%c144, %c0_26] : memref<840x64xf32, #tpu.memory_space<vmem>>, vector<16x32xf32>
    %cst_27 = arith.constant dense<0.000000e+00> : vector<32x32xf32>
    %63 = tpu.matmul %61, %62, %cst_27 {dimension_numbers = #tpu.dot_dimension_numbers<[1], [0], [0], [1], [0, 0, 1, 1], [], []>} : vector<32x16xf32>, vector<16x32xf32>, vector<32x32xf32> -> vector<32x32xf32>
    %64 = arith.addf %13, %63 : vector<32x32xf32>
    %c160 = arith.constant 160 : index
    %c0_28 = arith.constant 0 : index
    %65 = vector.load %arg3[%c160, %c0_28] : memref<840x64xf32, #tpu.memory_space<vmem>>, vector<32x16xf32>
    %cst_29 = arith.constant dense<0.000000e+00> : vector<32x16xf32>
    %66 = tpu.matmul %5, %65, %cst_29 {dimension_numbers = #tpu.dot_dimension_numbers<[1], [0], [0], [1], [0, 0, 1, 1], [], []>} : vector<32x32xf32>, vector<32x16xf32>, vector<32x16xf32> -> vector<32x16xf32>
    %67 = vector.extract_strided_slice %0 {offsets = [3, 0], sizes = [1, 16], strides = [1, 1]} : vector<32x64xf32> to vector<1x16xf32>
    %68 = vector.broadcast %67 : vector<1x16xf32> to vector<32x16xf32>
    %69 = arith.addf %66, %68 : vector<32x16xf32>
    %c192 = arith.constant 192 : index
    %c0_30 = arith.constant 0 : index
    %70 = vector.load %arg3[%c192, %c0_30] : memref<840x64xf32, #tpu.memory_space<vmem>>, vector<32x16xf32>
    %cst_31 = arith.constant dense<0.000000e+00> : vector<32x16xf32>
    %71 = tpu.matmul %5, %70, %cst_31 {dimension_numbers = #tpu.dot_dimension_numbers<[1], [0], [0], [1], [0, 0, 1, 1], [], []>} : vector<32x32xf32>, vector<32x16xf32>, vector<32x16xf32> -> vector<32x16xf32>
    %72 = vector.extract_strided_slice %0 {offsets = [4, 0], sizes = [1, 16], strides = [1, 1]} : vector<32x64xf32> to vector<1x16xf32>
    %73 = vector.broadcast %72 : vector<1x16xf32> to vector<32x16xf32>
    %74 = arith.addf %71, %73 : vector<32x16xf32>
    %c224 = arith.constant 224 : index
    %c0_32 = arith.constant 0 : index
    %75 = vector.load %arg3[%c224, %c0_32] : memref<840x64xf32, #tpu.memory_space<vmem>>, vector<32x16xf32>
    %cst_33 = arith.constant dense<0.000000e+00> : vector<32x16xf32>
    %76 = tpu.matmul %5, %75, %cst_33 {dimension_numbers = #tpu.dot_dimension_numbers<[1], [0], [0], [1], [0, 0, 1, 1], [], []>} : vector<32x32xf32>, vector<32x16xf32>, vector<32x16xf32> -> vector<32x16xf32>
    %77 = vector.extract_strided_slice %0 {offsets = [5, 0], sizes = [1, 16], strides = [1, 1]} : vector<32x64xf32> to vector<1x16xf32>
    %78 = vector.broadcast %77 : vector<1x16xf32> to vector<32x16xf32>
    %79 = arith.addf %76, %78 : vector<32x16xf32>
    %80 = vector.extract_strided_slice %69 {offsets = [0, 0], sizes = [16, 16], strides = [1, 1]} : vector<32x16xf32> to vector<16x16xf32>
    %81 = vector.extract_strided_slice %74 {offsets = [0, 0], sizes = [16, 16], strides = [1, 1]} : vector<32x16xf32> to vector<16x16xf32>
    %cst_34 = arith.constant dense<0.000000e+00> : vector<16x16xf32>
    %82 = tpu.matmul %80, %81, %cst_34 {dimension_numbers = #tpu.dot_dimension_numbers<[1], [1], [0], [0], [0, 0, 1, 0], [], []>} : vector<16x16xf32>, vector<16x16xf32>, vector<16x16xf32> -> vector<16x16xf32>
    %83 = arith.addf %82, %7 : vector<16x16xf32>
    %cst_35 = arith.constant dense<0xFF800000> : vector<16xf32>
    %84 = vector.multi_reduction <maximumf>, %83, %cst_35 [1] : vector<16x16xf32> to vector<16xf32>
    %85 = vector.shape_cast %84 : vector<16xf32> to vector<16x1xf32>
    %86 = vector.broadcast %85 : vector<16x1xf32> to vector<16x16xf32>
    %87 = arith.subf %83, %86 : vector<16x16xf32>
    %88 = math.exp %87 : vector<16x16xf32>
    %cst_36 = arith.constant dense<0.000000e+00> : vector<16xf32>
    %89 = vector.multi_reduction <add>, %88, %cst_36 [1] : vector<16x16xf32> to vector<16xf32>
    %90 = vector.shape_cast %89 : vector<16xf32> to vector<16x1xf32>
    %91 = tpu.reciprocal %90 {approx = true} : vector<16x1xf32> -> vector<16x1xf32>
    %92 = vector.broadcast %91 : vector<16x1xf32> to vector<16x16xf32>
    %93 = arith.mulf %88, %92 : vector<16x16xf32>
    %94 = vector.extract_strided_slice %79 {offsets = [0, 0], sizes = [16, 16], strides = [1, 1]} : vector<32x16xf32> to vector<16x16xf32>
    %cst_37 = arith.constant dense<0.000000e+00> : vector<16x16xf32>
    %95 = tpu.matmul %93, %94, %cst_37 {dimension_numbers = #tpu.dot_dimension_numbers<[1], [0], [0], [1], [0, 0, 1, 1], [], []>} : vector<16x16xf32>, vector<16x16xf32>, vector<16x16xf32> -> vector<16x16xf32>
    %96 = vector.extract_strided_slice %69 {offsets = [16, 0], sizes = [16, 16], strides = [1, 1]} : vector<32x16xf32> to vector<16x16xf32>
    %97 = vector.extract_strided_slice %74 {offsets = [16, 0], sizes = [16, 16], strides = [1, 1]} : vector<32x16xf32> to vector<16x16xf32>
    %cst_38 = arith.constant dense<0.000000e+00> : vector<16x16xf32>
    %98 = tpu.matmul %96, %97, %cst_38 {dimension_numbers = #tpu.dot_dimension_numbers<[1], [1], [0], [0], [0, 0, 1, 0], [], []>} : vector<16x16xf32>, vector<16x16xf32>, vector<16x16xf32> -> vector<16x16xf32>
    %99 = arith.addf %98, %9 : vector<16x16xf32>
    %cst_39 = arith.constant dense<0xFF800000> : vector<16xf32>
    %100 = vector.multi_reduction <maximumf>, %99, %cst_39 [1] : vector<16x16xf32> to vector<16xf32>
    %101 = vector.shape_cast %100 : vector<16xf32> to vector<16x1xf32>
    %102 = vector.broadcast %101 : vector<16x1xf32> to vector<16x16xf32>
    %103 = arith.subf %99, %102 : vector<16x16xf32>
    %104 = math.exp %103 : vector<16x16xf32>
    %cst_40 = arith.constant dense<0.000000e+00> : vector<16xf32>
    %105 = vector.multi_reduction <add>, %104, %cst_40 [1] : vector<16x16xf32> to vector<16xf32>
    %106 = vector.shape_cast %105 : vector<16xf32> to vector<16x1xf32>
    %107 = tpu.reciprocal %106 {approx = true} : vector<16x1xf32> -> vector<16x1xf32>
    %108 = vector.broadcast %107 : vector<16x1xf32> to vector<16x16xf32>
    %109 = arith.mulf %104, %108 : vector<16x16xf32>
    %110 = vector.extract_strided_slice %79 {offsets = [16, 0], sizes = [16, 16], strides = [1, 1]} : vector<32x16xf32> to vector<16x16xf32>
    %cst_41 = arith.constant dense<0.000000e+00> : vector<16x16xf32>
    %111 = tpu.matmul %109, %110, %cst_41 {dimension_numbers = #tpu.dot_dimension_numbers<[1], [0], [0], [1], [0, 0, 1, 1], [], []>} : vector<16x16xf32>, vector<16x16xf32>, vector<16x16xf32> -> vector<16x16xf32>
    %112 = tpu.concatenate %95, %111 in 0 : vector<16x16xf32>, vector<16x16xf32> -> vector<32x16xf32>
    %c256 = arith.constant 256 : index
    %c0_42 = arith.constant 0 : index
    %113 = vector.load %arg3[%c256, %c0_42] : memref<840x64xf32, #tpu.memory_space<vmem>>, vector<16x32xf32>
    %cst_43 = arith.constant dense<0.000000e+00> : vector<32x32xf32>
    %114 = tpu.matmul %112, %113, %cst_43 {dimension_numbers = #tpu.dot_dimension_numbers<[1], [0], [0], [1], [0, 0, 1, 1], [], []>} : vector<32x16xf32>, vector<16x32xf32>, vector<32x32xf32> -> vector<32x32xf32>
    %115 = arith.addf %64, %114 : vector<32x32xf32>
    %116 = arith.addf %5, %115 : vector<32x32xf32>
    %117 = vector.extract_strided_slice %0 {offsets = [7, 0], sizes = [1, 32], strides = [1, 1]} : vector<32x64xf32> to vector<1x32xf32>
    %118 = vector.extract_strided_slice %0 {offsets = [8, 0], sizes = [1, 32], strides = [1, 1]} : vector<32x64xf32> to vector<1x32xf32>
    %cst_44 = arith.constant dense<0.000000e+00> : vector<32xf32>
    %119 = vector.multi_reduction <add>, %116, %cst_44 [1] : vector<32x32xf32> to vector<32xf32>
    %120 = vector.shape_cast %119 : vector<32xf32> to vector<32x1xf32>
    %cst_45 = arith.constant 3.200000e+01 : f32
    %121 = vector.broadcast %cst_45 : f32 to vector<32x1xf32>
    %122 = arith.divf %120, %121 : vector<32x1xf32>
    %123 = vector.broadcast %122 : vector<32x1xf32> to vector<32x32xf32>
    %124 = arith.subf %116, %123 : vector<32x32xf32>
    %125 = arith.mulf %124, %124 : vector<32x32xf32>
    %cst_46 = arith.constant dense<0.000000e+00> : vector<32xf32>
    %126 = vector.multi_reduction <add>, %125, %cst_46 [1] : vector<32x32xf32> to vector<32xf32>
    %127 = vector.shape_cast %126 : vector<32xf32> to vector<32x1xf32>
    %cst_47 = arith.constant 3.200000e+01 : f32
    %128 = vector.broadcast %cst_47 : f32 to vector<32x1xf32>
    %129 = arith.divf %127, %128 : vector<32x1xf32>
    %130 = vector.broadcast %122 : vector<32x1xf32> to vector<32x32xf32>
    %131 = arith.subf %116, %130 : vector<32x32xf32>
    %cst_48 = arith.constant 9.99999974E-6 : f32
    %132 = vector.broadcast %cst_48 : f32 to vector<32x1xf32>
    %133 = arith.addf %129, %132 : vector<32x1xf32>
    %134 = math.rsqrt %133 : vector<32x1xf32>
    %135 = vector.broadcast %134 : vector<32x1xf32> to vector<32x32xf32>
    %136 = arith.mulf %131, %135 : vector<32x32xf32>
    %137 = vector.broadcast %117 : vector<1x32xf32> to vector<32x32xf32>
    %138 = arith.mulf %136, %137 : vector<32x32xf32>
    %139 = vector.broadcast %118 : vector<1x32xf32> to vector<32x32xf32>
    %140 = arith.addf %138, %139 : vector<32x32xf32>
    %c272 = arith.constant 272 : index
    %c0_49 = arith.constant 0 : index
    %141 = vector.load %arg3[%c272, %c0_49] : memref<840x64xf32, #tpu.memory_space<vmem>>, vector<32x64xf32>
    %cst_50 = arith.constant dense<0.000000e+00> : vector<32x64xf32>
    %142 = tpu.matmul %140, %141, %cst_50 {dimension_numbers = #tpu.dot_dimension_numbers<[1], [0], [0], [1], [0, 0, 1, 1], [], []>} : vector<32x32xf32>, vector<32x64xf32>, vector<32x64xf32> -> vector<32x64xf32>
    %143 = vector.extract_strided_slice %0 {offsets = [11, 0], sizes = [1, 64], strides = [1, 1]} : vector<32x64xf32> to vector<1x64xf32>
    %144 = vector.broadcast %143 : vector<1x64xf32> to vector<32x64xf32>
    %145 = arith.addf %142, %144 : vector<32x64xf32>
    %cst_51 = arith.constant 0.000000e+00 : f32
    %146 = vector.broadcast %cst_51 : f32 to vector<32x64xf32>
    %147 = arith.maximumf %145, %146 : vector<32x64xf32>
    %c304 = arith.constant 304 : index
    %c0_52 = arith.constant 0 : index
    %148 = vector.load %arg3[%c304, %c0_52] : memref<840x64xf32, #tpu.memory_space<vmem>>, vector<64x32xf32>
    %cst_53 = arith.constant dense<0.000000e+00> : vector<32x32xf32>
    %149 = tpu.matmul %147, %148, %cst_53 {dimension_numbers = #tpu.dot_dimension_numbers<[1], [0], [0], [1], [0, 0, 1, 1], [], []>} : vector<32x64xf32>, vector<64x32xf32>, vector<32x32xf32> -> vector<32x32xf32>
    %150 = vector.extract_strided_slice %0 {offsets = [12, 0], sizes = [1, 32], strides = [1, 1]} : vector<32x64xf32> to vector<1x32xf32>
    %151 = vector.broadcast %150 : vector<1x32xf32> to vector<32x32xf32>
    %152 = arith.addf %149, %151 : vector<32x32xf32>
    %153 = arith.addf %140, %152 : vector<32x32xf32>
    %154 = vector.extract_strided_slice %0 {offsets = [9, 0], sizes = [1, 32], strides = [1, 1]} : vector<32x64xf32> to vector<1x32xf32>
    %155 = vector.extract_strided_slice %0 {offsets = [10, 0], sizes = [1, 32], strides = [1, 1]} : vector<32x64xf32> to vector<1x32xf32>
    %cst_54 = arith.constant dense<0.000000e+00> : vector<32xf32>
    %156 = vector.multi_reduction <add>, %153, %cst_54 [1] : vector<32x32xf32> to vector<32xf32>
    %157 = vector.shape_cast %156 : vector<32xf32> to vector<32x1xf32>
    %cst_55 = arith.constant 3.200000e+01 : f32
    %158 = vector.broadcast %cst_55 : f32 to vector<32x1xf32>
    %159 = arith.divf %157, %158 : vector<32x1xf32>
    %160 = vector.broadcast %159 : vector<32x1xf32> to vector<32x32xf32>
    %161 = arith.subf %153, %160 : vector<32x32xf32>
    %162 = arith.mulf %161, %161 : vector<32x32xf32>
    %cst_56 = arith.constant dense<0.000000e+00> : vector<32xf32>
    %163 = vector.multi_reduction <add>, %162, %cst_56 [1] : vector<32x32xf32> to vector<32xf32>
    %164 = vector.shape_cast %163 : vector<32xf32> to vector<32x1xf32>
    %cst_57 = arith.constant 3.200000e+01 : f32
    %165 = vector.broadcast %cst_57 : f32 to vector<32x1xf32>
    %166 = arith.divf %164, %165 : vector<32x1xf32>
    %167 = vector.broadcast %159 : vector<32x1xf32> to vector<32x32xf32>
    %168 = arith.subf %153, %167 : vector<32x32xf32>
    %cst_58 = arith.constant 9.99999974E-6 : f32
    %169 = vector.broadcast %cst_58 : f32 to vector<32x1xf32>
    %170 = arith.addf %166, %169 : vector<32x1xf32>
    %171 = math.rsqrt %170 : vector<32x1xf32>
    %172 = vector.broadcast %171 : vector<32x1xf32> to vector<32x32xf32>
    %173 = arith.mulf %168, %172 : vector<32x32xf32>
    %174 = vector.broadcast %154 : vector<1x32xf32> to vector<32x32xf32>
    %175 = arith.mulf %173, %174 : vector<32x32xf32>
    %176 = vector.broadcast %155 : vector<1x32xf32> to vector<32x32xf32>
    %177 = arith.addf %175, %176 : vector<32x32xf32>
    %cst_59 = arith.constant 0.000000e+00 : f32
    %178 = vector.broadcast %cst_59 : f32 to vector<32x32xf32>
    %179 = vector.extract_strided_slice %0 {offsets = [19, 0], sizes = [1, 32], strides = [1, 1]} : vector<32x64xf32> to vector<1x32xf32>
    %180 = vector.broadcast %179 : vector<1x32xf32> to vector<32x32xf32>
    %181 = arith.addf %178, %180 : vector<32x32xf32>
    %c368 = arith.constant 368 : index
    %c0_60 = arith.constant 0 : index
    %182 = vector.load %arg3[%c368, %c0_60] : memref<840x64xf32, #tpu.memory_space<vmem>>, vector<32x16xf32>
    %cst_61 = arith.constant dense<0.000000e+00> : vector<32x16xf32>
    %183 = tpu.matmul %177, %182, %cst_61 {dimension_numbers = #tpu.dot_dimension_numbers<[1], [0], [0], [1], [0, 0, 1, 1], [], []>} : vector<32x32xf32>, vector<32x16xf32>, vector<32x16xf32> -> vector<32x16xf32>
    %184 = vector.extract_strided_slice %0 {offsets = [13, 0], sizes = [1, 16], strides = [1, 1]} : vector<32x64xf32> to vector<1x16xf32>
    %185 = vector.broadcast %184 : vector<1x16xf32> to vector<32x16xf32>
    %186 = arith.addf %183, %185 : vector<32x16xf32>
    %c400 = arith.constant 400 : index
    %c0_62 = arith.constant 0 : index
    %187 = vector.load %arg3[%c400, %c0_62] : memref<840x64xf32, #tpu.memory_space<vmem>>, vector<32x16xf32>
    %cst_63 = arith.constant dense<0.000000e+00> : vector<32x16xf32>
    %188 = tpu.matmul %177, %187, %cst_63 {dimension_numbers = #tpu.dot_dimension_numbers<[1], [0], [0], [1], [0, 0, 1, 1], [], []>} : vector<32x32xf32>, vector<32x16xf32>, vector<32x16xf32> -> vector<32x16xf32>
    %189 = vector.extract_strided_slice %0 {offsets = [14, 0], sizes = [1, 16], strides = [1, 1]} : vector<32x64xf32> to vector<1x16xf32>
    %190 = vector.broadcast %189 : vector<1x16xf32> to vector<32x16xf32>
    %191 = arith.addf %188, %190 : vector<32x16xf32>
    %c432 = arith.constant 432 : index
    %c0_64 = arith.constant 0 : index
    %192 = vector.load %arg3[%c432, %c0_64] : memref<840x64xf32, #tpu.memory_space<vmem>>, vector<32x16xf32>
    %cst_65 = arith.constant dense<0.000000e+00> : vector<32x16xf32>
    %193 = tpu.matmul %177, %192, %cst_65 {dimension_numbers = #tpu.dot_dimension_numbers<[1], [0], [0], [1], [0, 0, 1, 1], [], []>} : vector<32x32xf32>, vector<32x16xf32>, vector<32x16xf32> -> vector<32x16xf32>
    %194 = vector.extract_strided_slice %0 {offsets = [15, 0], sizes = [1, 16], strides = [1, 1]} : vector<32x64xf32> to vector<1x16xf32>
    %195 = vector.broadcast %194 : vector<1x16xf32> to vector<32x16xf32>
    %196 = arith.addf %193, %195 : vector<32x16xf32>
    %197 = vector.extract_strided_slice %186 {offsets = [0, 0], sizes = [16, 16], strides = [1, 1]} : vector<32x16xf32> to vector<16x16xf32>
    %198 = vector.extract_strided_slice %191 {offsets = [0, 0], sizes = [16, 16], strides = [1, 1]} : vector<32x16xf32> to vector<16x16xf32>
    %cst_66 = arith.constant dense<0.000000e+00> : vector<16x16xf32>
    %199 = tpu.matmul %197, %198, %cst_66 {dimension_numbers = #tpu.dot_dimension_numbers<[1], [1], [0], [0], [0, 0, 1, 0], [], []>} : vector<16x16xf32>, vector<16x16xf32>, vector<16x16xf32> -> vector<16x16xf32>
    %200 = arith.addf %199, %7 : vector<16x16xf32>
    %cst_67 = arith.constant dense<0xFF800000> : vector<16xf32>
    %201 = vector.multi_reduction <maximumf>, %200, %cst_67 [1] : vector<16x16xf32> to vector<16xf32>
    %202 = vector.shape_cast %201 : vector<16xf32> to vector<16x1xf32>
    %203 = vector.broadcast %202 : vector<16x1xf32> to vector<16x16xf32>
    %204 = arith.subf %200, %203 : vector<16x16xf32>
    %205 = math.exp %204 : vector<16x16xf32>
    %cst_68 = arith.constant dense<0.000000e+00> : vector<16xf32>
    %206 = vector.multi_reduction <add>, %205, %cst_68 [1] : vector<16x16xf32> to vector<16xf32>
    %207 = vector.shape_cast %206 : vector<16xf32> to vector<16x1xf32>
    %208 = tpu.reciprocal %207 {approx = true} : vector<16x1xf32> -> vector<16x1xf32>
    %209 = vector.broadcast %208 : vector<16x1xf32> to vector<16x16xf32>
    %210 = arith.mulf %205, %209 : vector<16x16xf32>
    %211 = vector.extract_strided_slice %196 {offsets = [0, 0], sizes = [16, 16], strides = [1, 1]} : vector<32x16xf32> to vector<16x16xf32>
    %cst_69 = arith.constant dense<0.000000e+00> : vector<16x16xf32>
    %212 = tpu.matmul %210, %211, %cst_69 {dimension_numbers = #tpu.dot_dimension_numbers<[1], [0], [0], [1], [0, 0, 1, 1], [], []>} : vector<16x16xf32>, vector<16x16xf32>, vector<16x16xf32> -> vector<16x16xf32>
    %213 = vector.extract_strided_slice %186 {offsets = [16, 0], sizes = [16, 16], strides = [1, 1]} : vector<32x16xf32> to vector<16x16xf32>
    %214 = vector.extract_strided_slice %191 {offsets = [16, 0], sizes = [16, 16], strides = [1, 1]} : vector<32x16xf32> to vector<16x16xf32>
    %cst_70 = arith.constant dense<0.000000e+00> : vector<16x16xf32>
    %215 = tpu.matmul %213, %214, %cst_70 {dimension_numbers = #tpu.dot_dimension_numbers<[1], [1], [0], [0], [0, 0, 1, 0], [], []>} : vector<16x16xf32>, vector<16x16xf32>, vector<16x16xf32> -> vector<16x16xf32>
    %216 = arith.addf %215, %9 : vector<16x16xf32>
    %cst_71 = arith.constant dense<0xFF800000> : vector<16xf32>
    %217 = vector.multi_reduction <maximumf>, %216, %cst_71 [1] : vector<16x16xf32> to vector<16xf32>
    %218 = vector.shape_cast %217 : vector<16xf32> to vector<16x1xf32>
    %219 = vector.broadcast %218 : vector<16x1xf32> to vector<16x16xf32>
    %220 = arith.subf %216, %219 : vector<16x16xf32>
    %221 = math.exp %220 : vector<16x16xf32>
    %cst_72 = arith.constant dense<0.000000e+00> : vector<16xf32>
    %222 = vector.multi_reduction <add>, %221, %cst_72 [1] : vector<16x16xf32> to vector<16xf32>
    %223 = vector.shape_cast %222 : vector<16xf32> to vector<16x1xf32>
    %224 = tpu.reciprocal %223 {approx = true} : vector<16x1xf32> -> vector<16x1xf32>
    %225 = vector.broadcast %224 : vector<16x1xf32> to vector<16x16xf32>
    %226 = arith.mulf %221, %225 : vector<16x16xf32>
    %227 = vector.extract_strided_slice %196 {offsets = [16, 0], sizes = [16, 16], strides = [1, 1]} : vector<32x16xf32> to vector<16x16xf32>
    %cst_73 = arith.constant dense<0.000000e+00> : vector<16x16xf32>
    %228 = tpu.matmul %226, %227, %cst_73 {dimension_numbers = #tpu.dot_dimension_numbers<[1], [0], [0], [1], [0, 0, 1, 1], [], []>} : vector<16x16xf32>, vector<16x16xf32>, vector<16x16xf32> -> vector<16x16xf32>
    %229 = tpu.concatenate %212, %228 in 0 : vector<16x16xf32>, vector<16x16xf32> -> vector<32x16xf32>
    %c464 = arith.constant 464 : index
    %c0_74 = arith.constant 0 : index
    %230 = vector.load %arg3[%c464, %c0_74] : memref<840x64xf32, #tpu.memory_space<vmem>>, vector<16x32xf32>
    %cst_75 = arith.constant dense<0.000000e+00> : vector<32x32xf32>
    %231 = tpu.matmul %229, %230, %cst_75 {dimension_numbers = #tpu.dot_dimension_numbers<[1], [0], [0], [1], [0, 0, 1, 1], [], []>} : vector<32x16xf32>, vector<16x32xf32>, vector<32x32xf32> -> vector<32x32xf32>
    %232 = arith.addf %181, %231 : vector<32x32xf32>
    %c480 = arith.constant 480 : index
    %c0_76 = arith.constant 0 : index
    %233 = vector.load %arg3[%c480, %c0_76] : memref<840x64xf32, #tpu.memory_space<vmem>>, vector<32x16xf32>
    %cst_77 = arith.constant dense<0.000000e+00> : vector<32x16xf32>
    %234 = tpu.matmul %177, %233, %cst_77 {dimension_numbers = #tpu.dot_dimension_numbers<[1], [0], [0], [1], [0, 0, 1, 1], [], []>} : vector<32x32xf32>, vector<32x16xf32>, vector<32x16xf32> -> vector<32x16xf32>
    %235 = vector.extract_strided_slice %0 {offsets = [16, 0], sizes = [1, 16], strides = [1, 1]} : vector<32x64xf32> to vector<1x16xf32>
    %236 = vector.broadcast %235 : vector<1x16xf32> to vector<32x16xf32>
    %237 = arith.addf %234, %236 : vector<32x16xf32>
    %c512 = arith.constant 512 : index
    %c0_78 = arith.constant 0 : index
    %238 = vector.load %arg3[%c512, %c0_78] : memref<840x64xf32, #tpu.memory_space<vmem>>, vector<32x16xf32>
    %cst_79 = arith.constant dense<0.000000e+00> : vector<32x16xf32>
    %239 = tpu.matmul %177, %238, %cst_79 {dimension_numbers = #tpu.dot_dimension_numbers<[1], [0], [0], [1], [0, 0, 1, 1], [], []>} : vector<32x32xf32>, vector<32x16xf32>, vector<32x16xf32> -> vector<32x16xf32>
    %240 = vector.extract_strided_slice %0 {offsets = [17, 0], sizes = [1, 16], strides = [1, 1]} : vector<32x64xf32> to vector<1x16xf32>
    %241 = vector.broadcast %240 : vector<1x16xf32> to vector<32x16xf32>
    %242 = arith.addf %239, %241 : vector<32x16xf32>
    %c544 = arith.constant 544 : index
    %c0_80 = arith.constant 0 : index
    %243 = vector.load %arg3[%c544, %c0_80] : memref<840x64xf32, #tpu.memory_space<vmem>>, vector<32x16xf32>
    %cst_81 = arith.constant dense<0.000000e+00> : vector<32x16xf32>
    %244 = tpu.matmul %177, %243, %cst_81 {dimension_numbers = #tpu.dot_dimension_numbers<[1], [0], [0], [1], [0, 0, 1, 1], [], []>} : vector<32x32xf32>, vector<32x16xf32>, vector<32x16xf32> -> vector<32x16xf32>
    %245 = vector.extract_strided_slice %0 {offsets = [18, 0], sizes = [1, 16], strides = [1, 1]} : vector<32x64xf32> to vector<1x16xf32>
    %246 = vector.broadcast %245 : vector<1x16xf32> to vector<32x16xf32>
    %247 = arith.addf %244, %246 : vector<32x16xf32>
    %248 = vector.extract_strided_slice %237 {offsets = [0, 0], sizes = [16, 16], strides = [1, 1]} : vector<32x16xf32> to vector<16x16xf32>
    %249 = vector.extract_strided_slice %242 {offsets = [0, 0], sizes = [16, 16], strides = [1, 1]} : vector<32x16xf32> to vector<16x16xf32>
    %cst_82 = arith.constant dense<0.000000e+00> : vector<16x16xf32>
    %250 = tpu.matmul %248, %249, %cst_82 {dimension_numbers = #tpu.dot_dimension_numbers<[1], [1], [0], [0], [0, 0, 1, 0], [], []>} : vector<16x16xf32>, vector<16x16xf32>, vector<16x16xf32> -> vector<16x16xf32>
    %251 = arith.addf %250, %7 : vector<16x16xf32>
    %cst_83 = arith.constant dense<0xFF800000> : vector<16xf32>
    %252 = vector.multi_reduction <maximumf>, %251, %cst_83 [1] : vector<16x16xf32> to vector<16xf32>
    %253 = vector.shape_cast %252 : vector<16xf32> to vector<16x1xf32>
    %254 = vector.broadcast %253 : vector<16x1xf32> to vector<16x16xf32>
    %255 = arith.subf %251, %254 : vector<16x16xf32>
    %256 = math.exp %255 : vector<16x16xf32>
    %cst_84 = arith.constant dense<0.000000e+00> : vector<16xf32>
    %257 = vector.multi_reduction <add>, %256, %cst_84 [1] : vector<16x16xf32> to vector<16xf32>
    %258 = vector.shape_cast %257 : vector<16xf32> to vector<16x1xf32>
    %259 = tpu.reciprocal %258 {approx = true} : vector<16x1xf32> -> vector<16x1xf32>
    %260 = vector.broadcast %259 : vector<16x1xf32> to vector<16x16xf32>
    %261 = arith.mulf %256, %260 : vector<16x16xf32>
    %262 = vector.extract_strided_slice %247 {offsets = [0, 0], sizes = [16, 16], strides = [1, 1]} : vector<32x16xf32> to vector<16x16xf32>
    %cst_85 = arith.constant dense<0.000000e+00> : vector<16x16xf32>
    %263 = tpu.matmul %261, %262, %cst_85 {dimension_numbers = #tpu.dot_dimension_numbers<[1], [0], [0], [1], [0, 0, 1, 1], [], []>} : vector<16x16xf32>, vector<16x16xf32>, vector<16x16xf32> -> vector<16x16xf32>
    %264 = vector.extract_strided_slice %237 {offsets = [16, 0], sizes = [16, 16], strides = [1, 1]} : vector<32x16xf32> to vector<16x16xf32>
    %265 = vector.extract_strided_slice %242 {offsets = [16, 0], sizes = [16, 16], strides = [1, 1]} : vector<32x16xf32> to vector<16x16xf32>
    %cst_86 = arith.constant dense<0.000000e+00> : vector<16x16xf32>
    %266 = tpu.matmul %264, %265, %cst_86 {dimension_numbers = #tpu.dot_dimension_numbers<[1], [1], [0], [0], [0, 0, 1, 0], [], []>} : vector<16x16xf32>, vector<16x16xf32>, vector<16x16xf32> -> vector<16x16xf32>
    %267 = arith.addf %266, %9 : vector<16x16xf32>
    %cst_87 = arith.constant dense<0xFF800000> : vector<16xf32>
    %268 = vector.multi_reduction <maximumf>, %267, %cst_87 [1] : vector<16x16xf32> to vector<16xf32>
    %269 = vector.shape_cast %268 : vector<16xf32> to vector<16x1xf32>
    %270 = vector.broadcast %269 : vector<16x1xf32> to vector<16x16xf32>
    %271 = arith.subf %267, %270 : vector<16x16xf32>
    %272 = math.exp %271 : vector<16x16xf32>
    %cst_88 = arith.constant dense<0.000000e+00> : vector<16xf32>
    %273 = vector.multi_reduction <add>, %272, %cst_88 [1] : vector<16x16xf32> to vector<16xf32>
    %274 = vector.shape_cast %273 : vector<16xf32> to vector<16x1xf32>
    %275 = tpu.reciprocal %274 {approx = true} : vector<16x1xf32> -> vector<16x1xf32>
    %276 = vector.broadcast %275 : vector<16x1xf32> to vector<16x16xf32>
    %277 = arith.mulf %272, %276 : vector<16x16xf32>
    %278 = vector.extract_strided_slice %247 {offsets = [16, 0], sizes = [16, 16], strides = [1, 1]} : vector<32x16xf32> to vector<16x16xf32>
    %cst_89 = arith.constant dense<0.000000e+00> : vector<16x16xf32>
    %279 = tpu.matmul %277, %278, %cst_89 {dimension_numbers = #tpu.dot_dimension_numbers<[1], [0], [0], [1], [0, 0, 1, 1], [], []>} : vector<16x16xf32>, vector<16x16xf32>, vector<16x16xf32> -> vector<16x16xf32>
    %280 = tpu.concatenate %263, %279 in 0 : vector<16x16xf32>, vector<16x16xf32> -> vector<32x16xf32>
    %c576 = arith.constant 576 : index
    %c0_90 = arith.constant 0 : index
    %281 = vector.load %arg3[%c576, %c0_90] : memref<840x64xf32, #tpu.memory_space<vmem>>, vector<16x32xf32>
    %cst_91 = arith.constant dense<0.000000e+00> : vector<32x32xf32>
    %282 = tpu.matmul %280, %281, %cst_91 {dimension_numbers = #tpu.dot_dimension_numbers<[1], [0], [0], [1], [0, 0, 1, 1], [], []>} : vector<32x16xf32>, vector<16x32xf32>, vector<32x32xf32> -> vector<32x32xf32>
    %283 = arith.addf %232, %282 : vector<32x32xf32>
    %284 = arith.addf %177, %283 : vector<32x32xf32>
    %285 = vector.extract_strided_slice %0 {offsets = [20, 0], sizes = [1, 32], strides = [1, 1]} : vector<32x64xf32> to vector<1x32xf32>
    %286 = vector.extract_strided_slice %0 {offsets = [21, 0], sizes = [1, 32], strides = [1, 1]} : vector<32x64xf32> to vector<1x32xf32>
    %cst_92 = arith.constant dense<0.000000e+00> : vector<32xf32>
    %287 = vector.multi_reduction <add>, %284, %cst_92 [1] : vector<32x32xf32> to vector<32xf32>
    %288 = vector.shape_cast %287 : vector<32xf32> to vector<32x1xf32>
    %cst_93 = arith.constant 3.200000e+01 : f32
    %289 = vector.broadcast %cst_93 : f32 to vector<32x1xf32>
    %290 = arith.divf %288, %289 : vector<32x1xf32>
    %291 = vector.broadcast %290 : vector<32x1xf32> to vector<32x32xf32>
    %292 = arith.subf %284, %291 : vector<32x32xf32>
    %293 = arith.mulf %292, %292 : vector<32x32xf32>
    %cst_94 = arith.constant dense<0.000000e+00> : vector<32xf32>
    %294 = vector.multi_reduction <add>, %293, %cst_94 [1] : vector<32x32xf32> to vector<32xf32>
    %295 = vector.shape_cast %294 : vector<32xf32> to vector<32x1xf32>
    %cst_95 = arith.constant 3.200000e+01 : f32
    %296 = vector.broadcast %cst_95 : f32 to vector<32x1xf32>
    %297 = arith.divf %295, %296 : vector<32x1xf32>
    %298 = vector.broadcast %290 : vector<32x1xf32> to vector<32x32xf32>
    %299 = arith.subf %284, %298 : vector<32x32xf32>
    %cst_96 = arith.constant 9.99999974E-6 : f32
    %300 = vector.broadcast %cst_96 : f32 to vector<32x1xf32>
    %301 = arith.addf %297, %300 : vector<32x1xf32>
    %302 = math.rsqrt %301 : vector<32x1xf32>
    %303 = vector.broadcast %302 : vector<32x1xf32> to vector<32x32xf32>
    %304 = arith.mulf %299, %303 : vector<32x32xf32>
    %305 = vector.broadcast %285 : vector<1x32xf32> to vector<32x32xf32>
    %306 = arith.mulf %304, %305 : vector<32x32xf32>
    %307 = vector.broadcast %286 : vector<1x32xf32> to vector<32x32xf32>
    %308 = arith.addf %306, %307 : vector<32x32xf32>
    %c592 = arith.constant 592 : index
    %c0_97 = arith.constant 0 : index
    %309 = vector.load %arg3[%c592, %c0_97] : memref<840x64xf32, #tpu.memory_space<vmem>>, vector<32x64xf32>
    %cst_98 = arith.constant dense<0.000000e+00> : vector<32x64xf32>
    %310 = tpu.matmul %308, %309, %cst_98 {dimension_numbers = #tpu.dot_dimension_numbers<[1], [0], [0], [1], [0, 0, 1, 1], [], []>} : vector<32x32xf32>, vector<32x64xf32>, vector<32x64xf32> -> vector<32x64xf32>
    %311 = vector.extract_strided_slice %0 {offsets = [24, 0], sizes = [1, 64], strides = [1, 1]} : vector<32x64xf32> to vector<1x64xf32>
    %312 = vector.broadcast %311 : vector<1x64xf32> to vector<32x64xf32>
    %313 = arith.addf %310, %312 : vector<32x64xf32>
    %cst_99 = arith.constant 0.000000e+00 : f32
    %314 = vector.broadcast %cst_99 : f32 to vector<32x64xf32>
    %315 = arith.maximumf %313, %314 : vector<32x64xf32>
    %c624 = arith.constant 624 : index
    %c0_100 = arith.constant 0 : index
    %316 = vector.load %arg3[%c624, %c0_100] : memref<840x64xf32, #tpu.memory_space<vmem>>, vector<64x32xf32>
    %cst_101 = arith.constant dense<0.000000e+00> : vector<32x32xf32>
    %317 = tpu.matmul %315, %316, %cst_101 {dimension_numbers = #tpu.dot_dimension_numbers<[1], [0], [0], [1], [0, 0, 1, 1], [], []>} : vector<32x64xf32>, vector<64x32xf32>, vector<32x32xf32> -> vector<32x32xf32>
    %318 = vector.extract_strided_slice %0 {offsets = [25, 0], sizes = [1, 32], strides = [1, 1]} : vector<32x64xf32> to vector<1x32xf32>
    %319 = vector.broadcast %318 : vector<1x32xf32> to vector<32x32xf32>
    %320 = arith.addf %317, %319 : vector<32x32xf32>
    %321 = arith.addf %308, %320 : vector<32x32xf32>
    %322 = vector.extract_strided_slice %0 {offsets = [22, 0], sizes = [1, 32], strides = [1, 1]} : vector<32x64xf32> to vector<1x32xf32>
    %323 = vector.extract_strided_slice %0 {offsets = [23, 0], sizes = [1, 32], strides = [1, 1]} : vector<32x64xf32> to vector<1x32xf32>
    %cst_102 = arith.constant dense<0.000000e+00> : vector<32xf32>
    %324 = vector.multi_reduction <add>, %321, %cst_102 [1] : vector<32x32xf32> to vector<32xf32>
    %325 = vector.shape_cast %324 : vector<32xf32> to vector<32x1xf32>
    %cst_103 = arith.constant 3.200000e+01 : f32
    %326 = vector.broadcast %cst_103 : f32 to vector<32x1xf32>
    %327 = arith.divf %325, %326 : vector<32x1xf32>
    %328 = vector.broadcast %327 : vector<32x1xf32> to vector<32x32xf32>
    %329 = arith.subf %321, %328 : vector<32x32xf32>
    %330 = arith.mulf %329, %329 : vector<32x32xf32>
    %cst_104 = arith.constant dense<0.000000e+00> : vector<32xf32>
    %331 = vector.multi_reduction <add>, %330, %cst_104 [1] : vector<32x32xf32> to vector<32xf32>
    %332 = vector.shape_cast %331 : vector<32xf32> to vector<32x1xf32>
    %cst_105 = arith.constant 3.200000e+01 : f32
    %333 = vector.broadcast %cst_105 : f32 to vector<32x1xf32>
    %334 = arith.divf %332, %333 : vector<32x1xf32>
    %335 = vector.broadcast %327 : vector<32x1xf32> to vector<32x32xf32>
    %336 = arith.subf %321, %335 : vector<32x32xf32>
    %cst_106 = arith.constant 9.99999974E-6 : f32
    %337 = vector.broadcast %cst_106 : f32 to vector<32x1xf32>
    %338 = arith.addf %334, %337 : vector<32x1xf32>
    %339 = math.rsqrt %338 : vector<32x1xf32>
    %340 = vector.broadcast %339 : vector<32x1xf32> to vector<32x32xf32>
    %341 = arith.mulf %336, %340 : vector<32x32xf32>
    %342 = vector.broadcast %322 : vector<1x32xf32> to vector<32x32xf32>
    %343 = arith.mulf %341, %342 : vector<32x32xf32>
    %344 = vector.broadcast %323 : vector<1x32xf32> to vector<32x32xf32>
    %345 = arith.addf %343, %344 : vector<32x32xf32>
    %346 = vector.extract_strided_slice %345 {offsets = [0, 0], sizes = [1, 32], strides = [1, 1]} : vector<32x32xf32> to vector<1x32xf32>
    %347 = vector.extract_strided_slice %345 {offsets = [16, 0], sizes = [1, 32], strides = [1, 1]} : vector<32x32xf32> to vector<1x32xf32>
    %348 = tpu.concatenate %346, %347 in 0 : vector<1x32xf32>, vector<1x32xf32> -> vector<2x32xf32>
    %c0_107 = arith.constant 0 : index
    %c0_108 = arith.constant 0 : index
    %349 = vector.load %arg2[%c0_107, %c0_108] : memref<2x4xf32, #tpu.memory_space<vmem>>, vector<2x4xf32>
    %c688 = arith.constant 688 : index
    %c0_109 = arith.constant 0 : index
    %350 = vector.load %arg3[%c688, %c0_109] : memref<840x64xf32, #tpu.memory_space<vmem>>, vector<4x32xf32>
    %cst_110 = arith.constant dense<0.000000e+00> : vector<2x32xf32>
    %351 = tpu.matmul %349, %350, %cst_110 {dimension_numbers = #tpu.dot_dimension_numbers<[1], [0], [0], [1], [0, 0, 1, 1], [], []>} : vector<2x4xf32>, vector<4x32xf32>, vector<2x32xf32> -> vector<2x32xf32>
    %352 = vector.extract_strided_slice %0 {offsets = [26, 0], sizes = [1, 32], strides = [1, 1]} : vector<32x64xf32> to vector<1x32xf32>
    %353 = vector.broadcast %352 : vector<1x32xf32> to vector<2x32xf32>
    %354 = arith.addf %351, %353 : vector<2x32xf32>
    %355 = tpu.concatenate %354, %348 in 1 : vector<2x32xf32>, vector<2x32xf32> -> vector<2x64xf32>
    %c696 = arith.constant 696 : index
    %c0_111 = arith.constant 0 : index
    %356 = vector.load %arg3[%c696, %c0_111] : memref<840x64xf32, #tpu.memory_space<vmem>>, vector<64x32xf32>
    %cst_112 = arith.constant dense<0.000000e+00> : vector<2x32xf32>
    %357 = tpu.matmul %355, %356, %cst_112 {dimension_numbers = #tpu.dot_dimension_numbers<[1], [0], [0], [1], [0, 0, 1, 1], [], []>} : vector<2x64xf32>, vector<64x32xf32>, vector<2x32xf32> -> vector<2x32xf32>
    %358 = vector.extract_strided_slice %0 {offsets = [27, 0], sizes = [1, 32], strides = [1, 1]} : vector<32x64xf32> to vector<1x32xf32>
    %359 = vector.broadcast %358 : vector<1x32xf32> to vector<2x32xf32>
    %360 = arith.addf %357, %359 : vector<2x32xf32>
    %cst_113 = arith.constant 0.000000e+00 : f32
    %361 = vector.broadcast %cst_113 : f32 to vector<2x32xf32>
    %362 = arith.maximumf %360, %361 : vector<2x32xf32>
    %c760 = arith.constant 760 : index
    %c0_114 = arith.constant 0 : index
    %363 = vector.load %arg3[%c760, %c0_114] : memref<840x64xf32, #tpu.memory_space<vmem>>, vector<32x16xf32>
    %cst_115 = arith.constant dense<0.000000e+00> : vector<2x16xf32>
    %364 = tpu.matmul %362, %363, %cst_115 {dimension_numbers = #tpu.dot_dimension_numbers<[1], [0], [0], [1], [0, 0, 1, 1], [], []>} : vector<2x32xf32>, vector<32x16xf32>, vector<2x16xf32> -> vector<2x16xf32>
    %365 = vector.extract_strided_slice %0 {offsets = [28, 0], sizes = [1, 16], strides = [1, 1]} : vector<32x64xf32> to vector<1x16xf32>
    %366 = vector.broadcast %365 : vector<1x16xf32> to vector<2x16xf32>
    %367 = arith.addf %364, %366 : vector<2x16xf32>
    %cst_116 = arith.constant 0.000000e+00 : f32
    %368 = vector.broadcast %cst_116 : f32 to vector<2x16xf32>
    %369 = arith.maximumf %367, %368 : vector<2x16xf32>
    %c792 = arith.constant 792 : index
    %c0_117 = arith.constant 0 : index
    %370 = vector.load %arg3[%c792, %c0_117] : memref<840x64xf32, #tpu.memory_space<vmem>>, vector<16x1xf32>
    %cst_118 = arith.constant dense<0.000000e+00> : vector<2x1xf32>
    %371 = tpu.matmul %369, %370, %cst_118 {dimension_numbers = #tpu.dot_dimension_numbers<[1], [0], [0], [1], [0, 0, 1, 1], [], []>} : vector<2x16xf32>, vector<16x1xf32>, vector<2x1xf32> -> vector<2x1xf32>
    %372 = vector.extract_strided_slice %0 {offsets = [29, 0], sizes = [1, 1], strides = [1, 1]} : vector<32x64xf32> to vector<1x1xf32>
    %373 = vector.broadcast %372 : vector<1x1xf32> to vector<2x1xf32>
    %374 = arith.addf %371, %373 : vector<2x1xf32>
    %c808 = arith.constant 808 : index
    %c0_119 = arith.constant 0 : index
    %375 = vector.load %arg3[%c808, %c0_119] : memref<840x64xf32, #tpu.memory_space<vmem>>, vector<32x6xf32>
    %cst_120 = arith.constant dense<0.000000e+00> : vector<2x6xf32>
    %376 = tpu.matmul %362, %375, %cst_120 {dimension_numbers = #tpu.dot_dimension_numbers<[1], [0], [0], [1], [0, 0, 1, 1], [], []>} : vector<2x32xf32>, vector<32x6xf32>, vector<2x6xf32> -> vector<2x6xf32>
    %377 = vector.extract_strided_slice %0 {offsets = [30, 0], sizes = [1, 6], strides = [1, 1]} : vector<32x64xf32> to vector<1x6xf32>
    %378 = vector.broadcast %377 : vector<1x6xf32> to vector<2x6xf32>
    %379 = arith.addf %376, %378 : vector<2x6xf32>
    %cst_121 = arith.constant 0.000000e+00 : f32
    %380 = vector.broadcast %cst_121 : f32 to vector<2x1xf32>
    %381 = tpu.concatenate %374, %379, %380 in 1 : vector<2x1xf32>, vector<2x6xf32>, vector<2x1xf32> -> vector<2x8xf32>
    %c0_122 = arith.constant 0 : index
    %c0_123 = arith.constant 0 : index
    %382 = vector.load %arg5[%c0_122, %c0_123] : memref<2x8xf32, #tpu.memory_space<vmem>>, vector<2x8xf32>
    tpu.vector_store %arg5[%c0_122, %c0_123], %381 {strides = array<i32>} : memref<2x8xf32, #tpu.memory_space<vmem>>, vector<2x8xf32>,
    return
  }
}

</mosaic_0001>

<llo_original>
// kernel: hybrid_forward.1
$region0: #{hybrid_forward.1}
  #allocation0 [shape = 'u32[]', space=smem, size = 0x4, offset = 0x4, fixed_abs, tag = 'smem constant byte address 0x4 - core index']
  #allocation1 [shape = 'u32[72,128]{1,0:T(1,128)}', space=vmem, size = 0x9000, scoped, tag = 'internal scratch']
  %s0 = inlined_call_operand.vmem [shape: f32[32,16], index: 0, kind: input, shape index: {}]
  %s1 = inlined_call_operand.vmem [shape: f32[2,16,16], index: 1, kind: input, shape index: {}]
  %s2 = inlined_call_operand.vmem [shape: f32[2,4], index: 2, kind: input, shape index: {}]
  %s3 = inlined_call_operand.vmem [shape: f32[840,64], index: 3, kind: input, shape index: {}]
  %s4 = inlined_call_operand.vmem [shape: f32[32,64], index: 4, kind: input, shape index: {}]
  %s5 = inlined_call_operand.vmem [shape: f32[2,8], index: 5, kind: output, shape index: {}]
  %s6 = sld [smem:[#allocation0]]
  $region30: #{hybrid_forward.1} parent=0
    _
  %s8 = ssub.s32 1, %s6
  %s9 = scalar_select 0, %s8, %s6
  // Predicated region
  $region2: #{hybrid_forward.1} parent=0 // pred_check
    _
  $region3: #{hybrid_forward.1} parent=0 // pred_check_branch
    %11 = sbr.rel (0) target = $region5
  $region4: #{hybrid_forward.1} parent=0 // pred_region
    _
  $region5: #{hybrid_forward.1} parent=0 // pred_fallthru
    _
  // Predicated region
  $region6: #{hybrid_forward.1} parent=0 // pred_check
    _
  $region7: #{hybrid_forward.1} parent=0 // pred_check_branch
    %13 = sbr.rel (0) target = $region9
  $region8: #{hybrid_forward.1} parent=0 // pred_region
    _
  $region9: #{hybrid_forward.1} parent=0 // pred_fallthru
    _
  // Predicated region
  $region10: #{hybrid_forward.1} parent=0 // pred_check
    _
  $region11: #{hybrid_forward.1} parent=0 // pred_check_branch
    %15 = sbr.rel (0) target = $region13
  $region12: #{hybrid_forward.1} parent=0 // pred_region
    _
  $region13: #{hybrid_forward.1} parent=0 // pred_fallthru
    _
  // Predicated region
  $region14: #{hybrid_forward.1} parent=0 // pred_check
    _
  $region15: #{hybrid_forward.1} parent=0 // pred_check_branch
    %17 = sbr.rel (0) target = $region17
  $region16: #{hybrid_forward.1} parent=0 // pred_region
    _
  $region17: #{hybrid_forward.1} parent=0 // pred_fallthru
    _
  // Predicated region
  $region18: #{hybrid_forward.1} parent=0 // pred_check
    _
  $region19: #{hybrid_forward.1} parent=0 // pred_check_branch
    %19 = sbr.rel (0) target = $region21
  $region20: #{hybrid_forward.1} parent=0 // pred_region
    _
  $region21: #{hybrid_forward.1} parent=0 // pred_fallthru
    _
  %v20 = vld [vmem:[%s4] sm:$0xff]
  %v21 = vld [vmem:[%s4 + $0x8] sm:$0xff]
  %v22 = vld [vmem:[%s4 + $0x10] sm:$0xff]
  %v23 = vld [vmem:[%s4 + $0x18] sm:$0xff]
  %v24 = vld [vmem:[%s0] sm:$0xff]
  %v25 = vld [vmem:[%s0 + $0x8] sm:$0xff]
  %v26 = vld [vmem:[%s0 + $0x10] sm:$0xff]
  %v27 = vld [vmem:[%s0 + $0x18] sm:$0xff]
  %v28 = vld [vmem:[%s3] sm:$0xff]
  %v29 = vld [vmem:[%s3 + $0x8] sm:$0xff]
  %v30 = vld [vmem:[%s3 + $0x10] sm:$0xff]
  %v31 = vld [vmem:[%s3 + $0x18] sm:$0xff]
  %v32 = vld [vmem:[%s3 + $0x20] sm:$0xff]
  %v33 = vld [vmem:[%s3 + $0x28] sm:$0xff]
  %vm34 = vcmask 130048
  %v36 = vsel %vm34, %v24, 0
  %v39 = vsel %vm34, %v25, 0
  %v42 = vsel %vm34, %v26, 0
  %v45 = vsel %vm34, %v27, 0
  %47 = vmatpush.msra.mxu0 0.0
  %48 = vmatpush.msra.mxu0 0.0
  %49 = vmatpush.msra.mxu0 0.0
  %50 = vmatpush.msra.mxu0 0.0
  %51 = vmatpush.msra.mxu0 0.0
  %52 = vmatpush.msra.mxu0 0.0
  %53 = vmatpush.msra.mxu0 0.0
  %54 = vmatpush.msra.mxu0 0.0
  %55 = vmatpush.msra.mxu0 0.0
  %56 = vmatpush.msra.mxu0 0.0
  %57 = vmatpush.msra.mxu0 0.0
  %58 = vmatpush.msra.mxu0 0.0
  %59 = vmatpush.msra.mxu0 0.0
  %60 = vmatpush.msra.mxu0 0.0
  %61 = vmatpush.msra.mxu0 %v29
  %62 = vmatpush.msra.mxu0 %v28
  %63 = vmatmul.f32.gmra.mxu0 %v36
  %v64 = vpop.f32.mrf.mxu0
  %v65 = vadd.f32 %v30, %v64
  %66 = vmatmul.f32.gmra.mxu0 %v39
  %v67 = vpop.f32.mrf.mxu0
  %v68 = vadd.f32 %v31, %v67
  %69 = vmatmul.f32.gmra.mxu0 %v42
  %v70 = vpop.f32.mrf.mxu0
  %v71 = vadd.f32 %v32, %v70
  %72 = vmatmul.f32.gmra.mxu0 %v45
  %v73 = vpop.f32.mrf.mxu0
  %v74 = vadd.f32 %v33, %v73
  %75 = vdwg.mxu0
  %v76 = vld [vmem:[%s1] sm:$0xff]
  %v77 = vld [vmem:[%s1 + $0x8] sm:$0xff]
  %s78 = scalar_lea.vmem %s1, 16
  %v79 = vld [vmem:[%s78] sm:$0xff]
  %v80 = vld [vmem:[%s78 + $0x8] sm:$0xff]
  %v81 = vperm.slane %v20, 6
  %v82 = vadd.f32 %v81, 0.0
  %v83 = vld [vmem:[%s3 + $0x30] sm:$0xff]
  %v84 = vld [vmem:[%s3 + $0x38] sm:$0xff]
  %v85 = vld [vmem:[%s3 + $0x40] sm:$0xff]
  %v86 = vld [vmem:[%s3 + $0x48] sm:$0xff]
  %v87 = vperm.slane %v20, 0
  %vm88 = vcmask 261120
  %v90 = vsel %vm88, %v65, 0
  %v93 = vsel %vm88, %v68, 0
  %v96 = vsel %vm88, %v71, 0
  %v99 = vsel %vm88, %v74, 0
  %101 = vmatpush.msra.mxu0 0.0
  %102 = vmatpush.msra.mxu0 0.0
  %103 = vmatpush.msra.mxu0 0.0
  %104 = vmatpush.msra.mxu0 0.0
  %105 = vmatpush.msra.mxu0 0.0
  %106 = vmatpush.msra.mxu0 0.0
  %107 = vmatpush.msra.mxu0 0.0
  %108 = vmatpush.msra.mxu0 0.0
  %109 = vmatpush.msra.mxu0 0.0
  %110 = vmatpush.msra.mxu0 0.0
  %111 = vmatpush.msra.mxu0 0.0
  %112 = vmatpush.msra.mxu0 0.0
  %113 = vmatpush.msra.mxu0 %v86
  %114 = vmatpush.msra.mxu0 %v85
  %115 = vmatpush.msra.mxu0 %v84
  %116 = vmatpush.msra.mxu0 %v83
  %117 = vmatmul.f32.gmra.mxu0 %v90
  %v118 = vpop.f32.mrf.mxu0
  %v119 = vadd.f32 %v87, %v118
  %120 = vmatmul.f32.gmra.mxu0 %v93
  %v121 = vpop.f32.mrf.mxu0
  %v122 = vadd.f32 %v87, %v121
  %123 = vmatmul.f32.gmra.mxu0 %v96
  %v124 = vpop.f32.mrf.mxu0
  %v125 = vadd.f32 %v87, %v124
  %126 = vmatmul.f32.gmra.mxu0 %v99
  %v127 = vpop.f32.mrf.mxu0
  %v128 = vadd.f32 %v87, %v127
  %129 = vdwg.mxu0
  %v130 = vld [vmem:[%s3 + $0x50] sm:$0xff]
  %v131 = vld [vmem:[%s3 + $0x58] sm:$0xff]
  %v132 = vld [vmem:[%s3 + $0x60] sm:$0xff]
  %v133 = vld [vmem:[%s3 + $0x68] sm:$0xff]
  %v134 = vperm.slane %v20, 1
  %135 = vmatpush.msra.mxu0 0.0
  %136 = vmatpush.msra.mxu0 0.0
  %137 = vmatpush.msra.mxu0 0.0
  %138 = vmatpush.msra.mxu0 0.0
  %139 = vmatpush.msra.mxu0 0.0
  %140 = vmatpush.msra.mxu0 0.0
  %141 = vmatpush.msra.mxu0 0.0
  %142 = vmatpush.msra.mxu0 0.0
  %143 = vmatpush.msra.mxu0 0.0
  %144 = vmatpush.msra.mxu0 0.0
  %145 = vmatpush.msra.mxu0 0.0
  %146 = vmatpush.msra.mxu0 0.0
  %147 = vmatpush.msra.mxu0 %v133
  %148 = vmatpush.msra.mxu0 %v132
  %149 = vmatpush.msra.mxu0 %v131
  %150 = vmatpush.msra.mxu0 %v130
  %151 = vmatmul.f32.gmra.mxu0 %v90
  %v152 = vpop.f32.mrf.mxu0
  %v153 = vadd.f32 %v134, %v152
  %154 = vmatmul.f32.gmra.mxu0 %v93
  %v155 = vpop.f32.mrf.mxu0
  %v156 = vadd.f32 %v134, %v155
  %157 = vmatmul.f32.gmra.mxu0 %v96
  %v158 = vpop.f32.mrf.mxu0
  %v159 = vadd.f32 %v134, %v158
  %160 = vmatmul.f32.gmra.mxu0 %v99
  %v161 = vpop.f32.mrf.mxu0
  %v162 = vadd.f32 %v134, %v161
  %163 = vdwg.mxu0
  %v164 = vld [vmem:[%s3 + $0x70] sm:$0xff]
  %v165 = vld [vmem:[%s3 + $0x78] sm:$0xff]
  %v166 = vld [vmem:[%s3 + $0x80] sm:$0xff]
  %v167 = vld [vmem:[%s3 + $0x88] sm:$0xff]
  %v168 = vperm.slane %v20, 2
  %169 = vmatpush.msra.mxu0 0.0
  %170 = vmatpush.msra.mxu0 0.0
  %171 = vmatpush.msra.mxu0 0.0
  %172 = vmatpush.msra.mxu0 0.0
  %173 = vmatpush.msra.mxu0 0.0
  %174 = vmatpush.msra.mxu0 0.0
  %175 = vmatpush.msra.mxu0 0.0
  %176 = vmatpush.msra.mxu0 0.0
  %177 = vmatpush.msra.mxu0 0.0
  %178 = vmatpush.msra.mxu0 0.0
  %179 = vmatpush.msra.mxu0 0.0
  %180 = vmatpush.msra.mxu0 0.0
  %181 = vmatpush.msra.mxu0 %v167
  %182 = vmatpush.msra.mxu0 %v166
  %183 = vmatpush.msra.mxu0 %v165
  %184 = vmatpush.msra.mxu0 %v164
  %185 = vmatmul.f32.gmra.mxu0 %v90
  %v186 = vpop.f32.mrf.mxu0
  %v187 = vadd.f32 %v168, %v186
  %188 = vmatmul.f32.gmra.mxu0 %v93
  %v189 = vpop.f32.mrf.mxu0
  %v190 = vadd.f32 %v168, %v189
  %191 = vmatmul.f32.gmra.mxu0 %v96
  %v192 = vpop.f32.mrf.mxu0
  %v193 = vadd.f32 %v168, %v192
  %194 = vmatmul.f32.gmra.mxu0 %v99
  %v195 = vpop.f32.mrf.mxu0
  %v196 = vadd.f32 %v168, %v195
  %197 = vdwg.mxu0
  %v199 = vsel %vm34, %v119, 0
  %v202 = vsel %vm34, %v122, 0
  %v205 = vsel %vm34, %v153, 0
  %v208 = vsel %vm34, %v156, 0
  %210 = vmatpush.xpose.msra.mxu0 0.0
  %211 = vmatpush.xpose.msra.mxu0 0.0
  %212 = vmatpush.xpose.msra.mxu0 0.0
  %213 = vmatpush.xpose.msra.mxu0 0.0
  %214 = vmatpush.xpose.msra.mxu0 0.0
  %215 = vmatpush.xpose.msra.mxu0 0.0
  %216 = vmatpush.xpose.msra.mxu0 0.0
  %217 = vmatpush.xpose.msra.mxu0 0.0
  %218 = vmatpush.xpose.msra.mxu0 0.0
  %219 = vmatpush.xpose.msra.mxu0 0.0
  %220 = vmatpush.xpose.msra.mxu0 0.0
  %221 = vmatpush.xpose.msra.mxu0 0.0
  %222 = vmatpush.xpose.msra.mxu0 0.0
  %223 = vmatpush.xpose.msra.mxu0 0.0
  %224 = vmatpush.xpose.msra.mxu0 %v208
  %225 = vmatpush.xpose.msra.mxu0 %v205
  %226 = vmatmul.f32.gmra.mxu0 %v199
  %v227 = vpop.f32.mrf.mxu0
  %v228 = vadd.f32 %v76, %v227
  %229 = vmatmul.f32.gmra.mxu0 %v202
  %v230 = vpop.f32.mrf.mxu0
  %v231 = vadd.f32 %v77, %v230
  %232 = vdwg.mxu0
  %v233 = vsel %vm34, %v228, -inf
  %234 = vmax.xlane.f32.xlu0 %v233
  %v235 = vpop.xlane.xlu0 %234
  %v236 = vsel %vm34, %v231, -inf
  %237 = vmax.xlane.f32.xlu0 %v236
  %v238 = vpop.xlane.xlu0 %237
  %v239 = vsub.f32 %v228, %v235
  %v240 = vsub.f32 %v231, %v238
  %v241 = vmul.f32 %v239, 1.442695
  %v242 = vpow.pop %v241
  %v243 = vmul.f32 %v240, 1.442695
  %v244 = vpow.pop %v243
  %v245 = vsel %vm34, %v242, 0.0
  %246 = vadd.xlane.f32.xlu0 %v245
  %v247 = vpop.xlane.xlu0 %246
  %v248 = vsel %vm34, %v244, 0.0
  %249 = vadd.xlane.f32.xlu0 %v248
  %v250 = vpop.xlane.xlu0 %249
  %v251 = vrcp.pop %v247
  %v252 = vrcp.pop %v250
  %v253 = vmul.f32 %v242, %v251
  %v254 = vmul.f32 %v244, %v252
  %v256 = vsel %vm34, %v253, 0
  %v259 = vsel %vm34, %v254, 0
  %261 = vmatpush.msra.mxu0 0.0
  %262 = vmatpush.msra.mxu0 0.0
  %263 = vmatpush.msra.mxu0 0.0
  %264 = vmatpush.msra.mxu0 0.0
  %265 = vmatpush.msra.mxu0 0.0
  %266 = vmatpush.msra.mxu0 0.0
  %267 = vmatpush.msra.mxu0 0.0
  %268 = vmatpush.msra.mxu0 0.0
  %269 = vmatpush.msra.mxu0 0.0
  %270 = vmatpush.msra.mxu0 0.0
  %271 = vmatpush.msra.mxu0 0.0
  %272 = vmatpush.msra.mxu0 0.0
  %273 = vmatpush.msra.mxu0 0.0
  %274 = vmatpush.msra.mxu0 0.0
  %275 = vmatpush.msra.mxu0 %v190
  %276 = vmatpush.msra.mxu0 %v187
  %277 = vmatmul.f32.gmra.mxu0 %v256
  %v278 = vpop.f32.mrf.mxu0
  %v279 = vadd.f32 0.0, %v278
  %280 = vmatmul.f32.gmra.mxu0 %v259
  %v281 = vpop.f32.mrf.mxu0
  %v282 = vadd.f32 0.0, %v281
  %283 = vdwg.mxu0
  %v285 = vsel %vm34, %v125, 0
  %v288 = vsel %vm34, %v128, 0
  %v291 = vsel %vm34, %v159, 0
  %v294 = vsel %vm34, %v162, 0
  %296 = vmatpush.xpose.msra.mxu0 0.0
  %297 = vmatpush.xpose.msra.mxu0 0.0
  %298 = vmatpush.xpose.msra.mxu0 0.0
  %299 = vmatpush.xpose.msra.mxu0 0.0
  %300 = vmatpush.xpose.msra.mxu0 0.0
  %301 = vmatpush.xpose.msra.mxu0 0.0
  %302 = vmatpush.xpose.msra.mxu0 0.0
  %303 = vmatpush.xpose.msra.mxu0 0.0
  %304 = vmatpush.xpose.msra.mxu0 0.0
  %305 = vmatpush.xpose.msra.mxu0 0.0
  %306 = vmatpush.xpose.msra.mxu0 0.0
  %307 = vmatpush.xpose.msra.mxu0 0.0
  %308 = vmatpush.xpose.msra.mxu0 0.0
  %309 = vmatpush.xpose.msra.mxu0 0.0
  %310 = vmatpush.xpose.msra.mxu0 %v294
  %311 = vmatpush.xpose.msra.mxu0 %v291
  %312 = vmatmul.f32.gmra.mxu0 %v285
  %v313 = vpop.f32.mrf.mxu0
  %v314 = vadd.f32 %v79, %v313
  %315 = vmatmul.f32.gmra.mxu0 %v288
  %v316 = vpop.f32.mrf.mxu0
  %v317 = vadd.f32 %v80, %v316
  %318 = vdwg.mxu0
  %v319 = vsel %vm34, %v314, -inf
  %320 = vmax.xlane.f32.xlu0 %v319
  %v321 = vpop.xlane.xlu0 %320
  %v322 = vsel %vm34, %v317, -inf
  %323 = vmax.xlane.f32.xlu0 %v322
  %v324 = vpop.xlane.xlu0 %323
  %v325 = vsub.f32 %v314, %v321
  %v326 = vsub.f32 %v317, %v324
  %v327 = vmul.f32 %v325, 1.442695
  %v328 = vpow.pop %v327
  %v329 = vmul.f32 %v326, 1.442695
  %v330 = vpow.pop %v329
  %v331 = vsel %vm34, %v328, 0.0
  %332 = vadd.xlane.f32.xlu0 %v331
  %v333 = vpop.xlane.xlu0 %332
  %v334 = vsel %vm34, %v330, 0.0
  %335 = vadd.xlane.f32.xlu0 %v334
  %v336 = vpop.xlane.xlu0 %335
  %v337 = vrcp.pop %v333
  %v338 = vrcp.pop %v336
  %v339 = vmul.f32 %v328, %v337
  %v340 = vmul.f32 %v330, %v338
  %v342 = vsel %vm34, %v339, 0
  %v345 = vsel %vm34, %v340, 0
  %347 = vmatpush.msra.mxu0 0.0
  %348 = vmatpush.msra.mxu0 0.0
  %349 = vmatpush.msra.mxu0 0.0
  %350 = vmatpush.msra.mxu0 0.0
  %351 = vmatpush.msra.mxu0 0.0
  %352 = vmatpush.msra.mxu0 0.0
  %353 = vmatpush.msra.mxu0 0.0
  %354 = vmatpush.msra.mxu0 0.0
  %355 = vmatpush.msra.mxu0 0.0
  %356 = vmatpush.msra.mxu0 0.0
  %357 = vmatpush.msra.mxu0 0.0
  %358 = vmatpush.msra.mxu0 0.0
  %359 = vmatpush.msra.mxu0 0.0
  %360 = vmatpush.msra.mxu0 0.0
  %361 = vmatpush.msra.mxu0 %v196
  %362 = vmatpush.msra.mxu0 %v193
  %363 = vmatmul.f32.gmra.mxu0 %v342
  %v364 = vpop.f32.mrf.mxu0
  %v365 = vadd.f32 0.0, %v364
  %366 = vmatmul.f32.gmra.mxu0 %v345
  %v367 = vpop.f32.mrf.mxu0
  %v368 = vadd.f32 0.0, %v367
  %369 = vdwg.mxu0
  %v370 = vld [vmem:[%s3 + $0x90] sm:$0xff]
  %v371 = vld [vmem:[%s3 + $0x98] sm:$0xff]
  %v373 = vsel %vm34, %v279, 0
  %v376 = vsel %vm34, %v282, 0
  %v379 = vsel %vm34, %v365, 0
  %v382 = vsel %vm34, %v368, 0
  %384 = vmatpush.msra.mxu0 0.0
  %385 = vmatpush.msra.mxu0 0.0
  %386 = vmatpush.msra.mxu0 0.0
  %387 = vmatpush.msra.mxu0 0.0
  %388 = vmatpush.msra.mxu0 0.0
  %389 = vmatpush.msra.mxu0 0.0
  %390 = vmatpush.msra.mxu0 0.0
  %391 = vmatpush.msra.mxu0 0.0
  %392 = vmatpush.msra.mxu0 0.0
  %393 = vmatpush.msra.mxu0 0.0
  %394 = vmatpush.msra.mxu0 0.0
  %395 = vmatpush.msra.mxu0 0.0
  %396 = vmatpush.msra.mxu0 0.0
  %397 = vmatpush.msra.mxu0 0.0
  %398 = vmatpush.msra.mxu0 %v371
  %399 = vmatpush.msra.mxu0 %v370
  %400 = vmatmul.f32.gmra.mxu0 %v373
  %v401 = vpop.f32.mrf.mxu0
  %v402 = vadd.f32 0.0, %v401
  %403 = vmatmul.f32.gmra.mxu0 %v376
  %v404 = vpop.f32.mrf.mxu0
  %v405 = vadd.f32 0.0, %v404
  %406 = vmatmul.f32.gmra.mxu0 %v379
  %v407 = vpop.f32.mrf.mxu0
  %v408 = vadd.f32 0.0, %v407
  %409 = vmatmul.f32.gmra.mxu0 %v382
  %v410 = vpop.f32.mrf.mxu0
  %v411 = vadd.f32 0.0, %v410
  %412 = vdwg.mxu0
  %v413 = vadd.f32 %v82, %v402
  %v414 = vadd.f32 %v82, %v405
  %v415 = vadd.f32 %v82, %v408
  %v416 = vadd.f32 %v82, %v411
  %v417 = vld [vmem:[%s3 + $0xa0] sm:$0xff]
  %v418 = vld [vmem:[%s3 + $0xa8] sm:$0xff]
  %v419 = vld [vmem:[%s3 + $0xb0] sm:$0xff]
  %v420 = vld [vmem:[%s3 + $0xb8] sm:$0xff]
  %v421 = vperm.slane %v20, 3
  %422 = vmatpush.msra.mxu0 0.0
  %423 = vmatpush.msra.mxu0 0.0
  %424 = vmatpush.msra.mxu0 0.0
  %425 = vmatpush.msra.mxu0 0.0
  %426 = vmatpush.msra.mxu0 0.0
  %427 = vmatpush.msra.mxu0 0.0
  %428 = vmatpush.msra.mxu0 0.0
  %429 = vmatpush.msra.mxu0 0.0
  %430 = vmatpush.msra.mxu0 0.0
  %431 = vmatpush.msra.mxu0 0.0
  %432 = vmatpush.msra.mxu0 0.0
  %433 = vmatpush.msra.mxu0 0.0
  %434 = vmatpush.msra.mxu0 %v420
  %435 = vmatpush.msra.mxu0 %v419
  %436 = vmatpush.msra.mxu0 %v418
  %437 = vmatpush.msra.mxu0 %v417
  %438 = vmatmul.f32.gmra.mxu0 %v90
  %v439 = vpop.f32.mrf.mxu0
  %v440 = vadd.f32 %v421, %v439
  %441 = vmatmul.f32.gmra.mxu0 %v93
  %v442 = vpop.f32.mrf.mxu0
  %v443 = vadd.f32 %v421, %v442
  %444 = vmatmul.f32.gmra.mxu0 %v96
  %v445 = vpop.f32.mrf.mxu0
  %v446 = vadd.f32 %v421, %v445
  %447 = vmatmul.f32.gmra.mxu0 %v99
  %v448 = vpop.f32.mrf.mxu0
  %v449 = vadd.f32 %v421, %v448
  %450 = vdwg.mxu0
  %v451 = vld [vmem:[%s3 + $0xc0] sm:$0xff]
  %v452 = vld [vmem:[%s3 + $0xc8] sm:$0xff]
  %v453 = vld [vmem:[%s3 + $0xd0] sm:$0xff]
  %v454 = vld [vmem:[%s3 + $0xd8] sm:$0xff]
  %v455 = vperm.slane %v20, 4
  %456 = vmatpush.msra.mxu0 0.0
  %457 = vmatpush.msra.mxu0 0.0
  %458 = vmatpush.msra.mxu0 0.0
  %459 = vmatpush.msra.mxu0 0.0
  %460 = vmatpush.msra.mxu0 0.0
  %461 = vmatpush.msra.mxu0 0.0
  %462 = vmatpush.msra.mxu0 0.0
  %463 = vmatpush.msra.mxu0 0.0
  %464 = vmatpush.msra.mxu0 0.0
  %465 = vmatpush.msra.mxu0 0.0
  %466 = vmatpush.msra.mxu0 0.0
  %467 = vmatpush.msra.mxu0 0.0
  %468 = vmatpush.msra.mxu0 %v454
  %469 = vmatpush.msra.mxu0 %v453
  %470 = vmatpush.msra.mxu0 %v452
  %471 = vmatpush.msra.mxu0 %v451
  %472 = vmatmul.f32.gmra.mxu0 %v90
  %v473 = vpop.f32.mrf.mxu0
  %v474 = vadd.f32 %v455, %v473
  %475 = vmatmul.f32.gmra.mxu0 %v93
  %v476 = vpop.f32.mrf.mxu0
  %v477 = vadd.f32 %v455, %v476
  %478 = vmatmul.f32.gmra.mxu0 %v96
  %v479 = vpop.f32.mrf.mxu0
  %v480 = vadd.f32 %v455, %v479
  %481 = vmatmul.f32.gmra.mxu0 %v99
  %v482 = vpop.f32.mrf.mxu0
  %v483 = vadd.f32 %v455, %v482
  %484 = vdwg.mxu0
  %v485 = vld [vmem:[%s3 + $0xe0] sm:$0xff]
  %v486 = vld [vmem:[%s3 + $0xe8] sm:$0xff]
  %v487 = vld [vmem:[%s3 + $0xf0] sm:$0xff]
  %v488 = vld [vmem:[%s3 + $0xf8] sm:$0xff]
  %v489 = vperm.slane %v20, 5
  %490 = vmatpush.msra.mxu0 0.0
  %491 = vmatpush.msra.mxu0 0.0
  %492 = vmatpush.msra.mxu0 0.0
  %493 = vmatpush.msra.mxu0 0.0
  %494 = vmatpush.msra.mxu0 0.0
  %495 = vmatpush.msra.mxu0 0.0
  %496 = vmatpush.msra.mxu0 0.0
  %497 = vmatpush.msra.mxu0 0.0
  %498 = vmatpush.msra.mxu0 0.0
  %499 = vmatpush.msra.mxu0 0.0
  %500 = vmatpush.msra.mxu0 0.0
  %501 = vmatpush.msra.mxu0 0.0
  %502 = vmatpush.msra.mxu0 %v488
  %503 = vmatpush.msra.mxu0 %v487
  %504 = vmatpush.msra.mxu0 %v486
  %505 = vmatpush.msra.mxu0 %v485
  %506 = vmatmul.f32.gmra.mxu0 %v90
  %v507 = vpop.f32.mrf.mxu0
  %v508 = vadd.f32 %v489, %v507
  %509 = vmatmul.f32.gmra.mxu0 %v93
  %v510 = vpop.f32.mrf.mxu0
  %v511 = vadd.f32 %v489, %v510
  %512 = vmatmul.f32.gmra.mxu0 %v96
  %v513 = vpop.f32.mrf.mxu0
  %v514 = vadd.f32 %v489, %v513
  %515 = vmatmul.f32.gmra.mxu0 %v99
  %v516 = vpop.f32.mrf.mxu0
  %v517 = vadd.f32 %v489, %v516
  %518 = vdwg.mxu0
  %v520 = vsel %vm34, %v440, 0
  %v523 = vsel %vm34, %v443, 0
  %v526 = vsel %vm34, %v474, 0
  %v529 = vsel %vm34, %v477, 0
  %531 = vmatpush.xpose.msra.mxu0 0.0
  %532 = vmatpush.xpose.msra.mxu0 0.0
  %533 = vmatpush.xpose.msra.mxu0 0.0
  %534 = vmatpush.xpose.msra.mxu0 0.0
  %535 = vmatpush.xpose.msra.mxu0 0.0
  %536 = vmatpush.xpose.msra.mxu0 0.0
  %537 = vmatpush.xpose.msra.mxu0 0.0
  %538 = vmatpush.xpose.msra.mxu0 0.0
  %539 = vmatpush.xpose.msra.mxu0 0.0
  %540 = vmatpush.xpose.msra.mxu0 0.0
  %541 = vmatpush.xpose.msra.mxu0 0.0
  %542 = vmatpush.xpose.msra.mxu0 0.0
  %543 = vmatpush.xpose.msra.mxu0 0.0
  %544 = vmatpush.xpose.msra.mxu0 0.0
  %545 = vmatpush.xpose.msra.mxu0 %v529
  %546 = vmatpush.xpose.msra.mxu0 %v526
  %547 = vmatmul.f32.gmra.mxu0 %v520
  %v548 = vpop.f32.mrf.mxu0
  %v549 = vadd.f32 %v76, %v548
  %550 = vmatmul.f32.gmra.mxu0 %v523
  %v551 = vpop.f32.mrf.mxu0
  %v552 = vadd.f32 %v77, %v551
  %553 = vdwg.mxu0
  %v554 = vsel %vm34, %v549, -inf
  %555 = vmax.xlane.f32.xlu0 %v554
  %v556 = vpop.xlane.xlu0 %555
  %v557 = vsel %vm34, %v552, -inf
  %558 = vmax.xlane.f32.xlu0 %v557
  %v559 = vpop.xlane.xlu0 %558
  %v560 = vsub.f32 %v549, %v556
  %v561 = vsub.f32 %v552, %v559
  %v562 = vmul.f32 %v560, 1.442695
  %v563 = vpow.pop %v562
  %v564 = vmul.f32 %v561, 1.442695
  %v565 = vpow.pop %v564
  %v566 = vsel %vm34, %v563, 0.0
  %567 = vadd.xlane.f32.xlu0 %v566
  %v568 = vpop.xlane.xlu0 %567
  %v569 = vsel %vm34, %v565, 0.0
  %570 = vadd.xlane.f32.xlu0 %v569
  %v571 = vpop.xlane.xlu0 %570
  %v572 = vrcp.pop %v568
  %v573 = vrcp.pop %v571
  %v574 = vmul.f32 %v563, %v572
  %v575 = vmul.f32 %v565, %v573
  %v577 = vsel %vm34, %v574, 0
  %v580 = vsel %vm34, %v575, 0
  %582 = vmatpush.msra.mxu0 0.0
  %583 = vmatpush.msra.mxu0 0.0
  %584 = vmatpush.msra.mxu0 0.0
  %585 = vmatpush.msra.mxu0 0.0
  %586 = vmatpush.msra.mxu0 0.0
  %587 = vmatpush.msra.mxu0 0.0
  %588 = vmatpush.msra.mxu0 0.0
  %589 = vmatpush.msra.mxu0 0.0
  %590 = vmatpush.msra.mxu0 0.0
  %591 = vmatpush.msra.mxu0 0.0
  %592 = vmatpush.msra.mxu0 0.0
  %593 = vmatpush.msra.mxu0 0.0
  %594 = vmatpush.msra.mxu0 0.0
  %595 = vmatpush.msra.mxu0 0.0
  %596 = vmatpush.msra.mxu0 %v511
  %597 = vmatpush.msra.mxu0 %v508
  %598 = vmatmul.f32.gmra.mxu0 %v577
  %v599 = vpop.f32.mrf.mxu0
  %v600 = vadd.f32 0.0, %v599
  %601 = vmatmul.f32.gmra.mxu0 %v580
  %v602 = vpop.f32.mrf.mxu0
  %v603 = vadd.f32 0.0, %v602
  %604 = vdwg.mxu0
  %v606 = vsel %vm34, %v446, 0
  %v609 = vsel %vm34, %v449, 0
  %v612 = vsel %vm34, %v480, 0
  %v615 = vsel %vm34, %v483, 0
  %617 = vmatpush.xpose.msra.mxu0 0.0
  %618 = vmatpush.xpose.msra.mxu0 0.0
  %619 = vmatpush.xpose.msra.mxu0 0.0
  %620 = vmatpush.xpose.msra.mxu0 0.0
  %621 = vmatpush.xpose.msra.mxu0 0.0
  %622 = vmatpush.xpose.msra.mxu0 0.0
  %623 = vmatpush.xpose.msra.mxu0 0.0
  %624 = vmatpush.xpose.msra.mxu0 0.0
  %625 = vmatpush.xpose.msra.mxu0 0.0
  %626 = vmatpush.xpose.msra.mxu0 0.0
  %627 = vmatpush.xpose.msra.mxu0 0.0
  %628 = vmatpush.xpose.msra.mxu0 0.0
  %629 = vmatpush.xpose.msra.mxu0 0.0
  %630 = vmatpush.xpose.msra.mxu0 0.0
  %631 = vmatpush.xpose.msra.mxu0 %v615
  %632 = vmatpush.xpose.msra.mxu0 %v612
  %633 = vmatmul.f32.gmra.mxu0 %v606
  %v634 = vpop.f32.mrf.mxu0
  %v635 = vadd.f32 %v79, %v634
  %636 = vmatmul.f32.gmra.mxu0 %v609
  %v637 = vpop.f32.mrf.mxu0
  %v638 = vadd.f32 %v80, %v637
  %639 = vdwg.mxu0
  %v640 = vsel %vm34, %v635, -inf
  %641 = vmax.xlane.f32.xlu0 %v640
  %v642 = vpop.xlane.xlu0 %641
  %v643 = vsel %vm34, %v638, -inf
  %644 = vmax.xlane.f32.xlu0 %v643
  %v645 = vpop.xlane.xlu0 %644
  %v646 = vsub.f32 %v635, %v642
  %v647 = vsub.f32 %v638, %v645
  %v648 = vmul.f32 %v646, 1.442695
  %v649 = vpow.pop %v648
  %v650 = vmul.f32 %v647, 1.442695
  %v651 = vpow.pop %v650
  %v652 = vsel %vm34, %v649, 0.0
  %653 = vadd.xlane.f32.xlu0 %v652
  %v654 = vpop.xlane.xlu0 %653
  %v655 = vsel %vm34, %v651, 0.0
  %656 = vadd.xlane.f32.xlu0 %v655
  %v657 = vpop.xlane.xlu0 %656
  %v658 = vrcp.pop %v654
  %v659 = vrcp.pop %v657
  %v660 = vmul.f32 %v649, %v658
  %v661 = vmul.f32 %v651, %v659
  %v663 = vsel %vm34, %v660, 0
  %v666 = vsel %vm34, %v661, 0
  %668 = vmatpush.msra.mxu0 0.0
  %669 = vmatpush.msra.mxu0 0.0
  %670 = vmatpush.msra.mxu0 0.0
  %671 = vmatpush.msra.mxu0 0.0
  %672 = vmatpush.msra.mxu0 0.0
  %673 = vmatpush.msra.mxu0 0.0
  %674 = vmatpush.msra.mxu0 0.0
  %675 = vmatpush.msra.mxu0 0.0
  %676 = vmatpush.msra.mxu0 0.0
  %677 = vmatpush.msra.mxu0 0.0
  %678 = vmatpush.msra.mxu0 0.0
  %679 = vmatpush.msra.mxu0 0.0
  %680 = vmatpush.msra.mxu0 0.0
  %681 = vmatpush.msra.mxu0 0.0
  %682 = vmatpush.msra.mxu0 %v517
  %683 = vmatpush.msra.mxu0 %v514
  %684 = vmatmul.f32.gmra.mxu0 %v663
  %v685 = vpop.f32.mrf.mxu0
  %v686 = vadd.f32 0.0, %v685
  %687 = vmatmul.f32.gmra.mxu0 %v666
  %v688 = vpop.f32.mrf.mxu0
  %v689 = vadd.f32 0.0, %v688
  %690 = vdwg.mxu0
  %v691 = vld [vmem:[%s3 + $0x100] sm:$0xff]
  %v692 = vld [vmem:[%s3 + $0x108] sm:$0xff]
  %v694 = vsel %vm34, %v600, 0
  %v697 = vsel %vm34, %v603, 0
  %v700 = vsel %vm34, %v686, 0
  %v703 = vsel %vm34, %v689, 0
  %705 = vmatpush.msra.mxu0 0.0
  %706 = vmatpush.msra.mxu0 0.0
  %707 = vmatpush.msra.mxu0 0.0
  %708 = vmatpush.msra.mxu0 0.0
  %709 = vmatpush.msra.mxu0 0.0
  %710 = vmatpush.msra.mxu0 0.0
  %711 = vmatpush.msra.mxu0 0.0
  %712 = vmatpush.msra.mxu0 0.0
  %713 = vmatpush.msra.mxu0 0.0
  %714 = vmatpush.msra.mxu0 0.0
  %715 = vmatpush.msra.mxu0 0.0
  %716 = vmatpush.msra.mxu0 0.0
  %717 = vmatpush.msra.mxu0 0.0
  %718 = vmatpush.msra.mxu0 0.0
  %719 = vmatpush.msra.mxu0 %v692
  %720 = vmatpush.msra.mxu0 %v691
  %721 = vmatmul.f32.gmra.mxu0 %v694
  %v722 = vpop.f32.mrf.mxu0
  %v723 = vadd.f32 0.0, %v722
  %724 = vmatmul.f32.gmra.mxu0 %v697
  %v725 = vpop.f32.mrf.mxu0
  %v726 = vadd.f32 0.0, %v725
  %727 = vmatmul.f32.gmra.mxu0 %v700
  %v728 = vpop.f32.mrf.mxu0
  %v729 = vadd.f32 0.0, %v728
  %730 = vmatmul.f32.gmra.mxu0 %v703
  %v731 = vpop.f32.mrf.mxu0
  %v732 = vadd.f32 0.0, %v731
  %733 = vdwg.mxu0
  %v734 = vadd.f32 %v413, %v723
  %v735 = vadd.f32 %v414, %v726
  %v736 = vadd.f32 %v415, %v729
  %v737 = vadd.f32 %v416, %v732
  %v738 = vadd.f32 %v65, %v734
  %v739 = vadd.f32 %v68, %v735
  %v740 = vadd.f32 %v71, %v736
  %v741 = vadd.f32 %v74, %v737
  %v742 = vsel %vm88, %v738, 0.0
  %743 = vadd.xlane.f32.xlu0 %v742
  %v744 = vpop.xlane.xlu0 %743
  %v745 = vsel %vm88, %v739, 0.0
  %746 = vadd.xlane.f32.xlu0 %v745
  %v747 = vpop.xlane.xlu0 %746
  %v748 = vsel %vm88, %v740, 0.0
  %749 = vadd.xlane.f32.xlu0 %v748
  %v750 = vpop.xlane.xlu0 %749
  %v751 = vsel %vm88, %v741, 0.0
  %752 = vadd.xlane.f32.xlu0 %v751
  %v753 = vpop.xlane.xlu0 %752
  %v754 = vrcp.pop 32.0
  %v755 = vmul.f32 32.0, %v754
  %v756 = vsub.f32 1.0, %v755
  %v757 = vmul.f32 %v754, %v756
  %v758 = vadd.f32 %v754, %v757
  %vm759 = vweird.f32 %v754
  %v760 = vsel %vm759, %v754, %v758
  %v761 = vmul.f32 %v744, %v760
  %v762 = vmul.f32 %v747, %v760
  %v763 = vmul.f32 %v750, %v760
  %v764 = vmul.f32 %v753, %v760
  %v765 = vsub.f32 %v738, %v761
  %v766 = vsub.f32 %v739, %v762
  %v767 = vsub.f32 %v740, %v763
  %v768 = vsub.f32 %v741, %v764
  %v769 = vmul.f32 %v765, %v765
  %v770 = vmul.f32 %v766, %v766
  %v771 = vmul.f32 %v767, %v767
  %v772 = vmul.f32 %v768, %v768
  %v773 = vsel %vm88, %v769, 0.0
  %774 = vadd.xlane.f32.xlu0 %v773
  %v775 = vpop.xlane.xlu0 %774
  %v776 = vsel %vm88, %v770, 0.0
  %777 = vadd.xlane.f32.xlu0 %v776
  %v778 = vpop.xlane.xlu0 %777
  %v779 = vsel %vm88, %v771, 0.0
  %780 = vadd.xlane.f32.xlu0 %v779
  %v781 = vpop.xlane.xlu0 %780
  %v782 = vsel %vm88, %v772, 0.0
  %783 = vadd.xlane.f32.xlu0 %v782
  %v784 = vpop.xlane.xlu0 %783
  %v785 = vmul.f32 %v775, %v760
  %v786 = vmul.f32 %v778, %v760
  %v787 = vmul.f32 %v781, %v760
  %v788 = vmul.f32 %v784, %v760
  %v789 = vadd.f32 %v785, 1e-05
  %v790 = vadd.f32 %v786, 1e-05
  %v791 = vadd.f32 %v787, 1e-05
  %v792 = vadd.f32 %v788, 1e-05
  %v793 = vrsqrt.pop %v789
  %v794 = vmul.f32 %v793, %v789
  %v795 = vmul.f32 %v794, %v793
  %v796 = vmul.f32 0.5, %v795
  %v797 = vsub.f32 1.5, %v796
  %v798 = vmul.f32 %v793, %v797
  %vm799 = vweird.f32 %v789
  %vm800 = vweird.f32 %v793
  %vm801 = vmor %vm799, %vm800
  %v802 = vsel %vm801, %v793, %v798
  %v803 = vrsqrt.pop %v790
  %v804 = vmul.f32 %v803, %v790
  %v805 = vmul.f32 %v804, %v803
  %v806 = vmul.f32 0.5, %v805
  %v807 = vsub.f32 1.5, %v806
  %v808 = vmul.f32 %v803, %v807
  %vm809 = vweird.f32 %v790
  %vm810 = vweird.f32 %v803
  %vm811 = vmor %vm809, %vm810
  %v812 = vsel %vm811, %v803, %v808
  %v813 = vrsqrt.pop %v791
  %v814 = vmul.f32 %v813, %v791
  %v815 = vmul.f32 %v814, %v813
  %v816 = vmul.f32 0.5, %v815
  %v817 = vsub.f32 1.5, %v816
  %v818 = vmul.f32 %v813, %v817
  %vm819 = vweird.f32 %v791
  %vm820 = vweird.f32 %v813
  %vm821 = vmor %vm819, %vm820
  %v822 = vsel %vm821, %v813, %v818
  %v823 = vrsqrt.pop %v792
  %v824 = vmul.f32 %v823, %v792
  %v825 = vmul.f32 %v824, %v823
  %v826 = vmul.f32 0.5, %v825
  %v827 = vsub.f32 1.5, %v826
  %v828 = vmul.f32 %v823, %v827
  %vm829 = vweird.f32 %v792
  %vm830 = vweird.f32 %v823
  %vm831 = vmor %vm829, %vm830
  %v832 = vsel %vm831, %v823, %v828
  %v833 = vmul.f32 %v765, %v802
  %v834 = vmul.f32 %v766, %v812
  %v835 = vmul.f32 %v767, %v822
  %v836 = vmul.f32 %v768, %v832
  %v837 = vperm.slane %v20, 7
  %v838 = vmul.f32 %v833, %v837
  %v839 = vmul.f32 %v834, %v837
  %v840 = vmul.f32 %v835, %v837
  %v841 = vmul.f32 %v836, %v837
  %v842 = vperm.slane %v21, 0
  %v843 = vadd.f32 %v838, %v842
  %v844 = vadd.f32 %v839, %v842
  %v845 = vadd.f32 %v840, %v842
  %v846 = vadd.f32 %v841, %v842
  %v847 = vld [vmem:[%s3 + $0x110] sm:$0xff]
  %v848 = vld [vmem:[%s3 + $0x118] sm:$0xff]
  %v849 = vld [vmem:[%s3 + $0x120] sm:$0xff]
  %v850 = vld [vmem:[%s3 + $0x128] sm:$0xff]
  %v851 = vperm.slane %v21, 3
  %v853 = vsel %vm88, %v843, 0
  %v856 = vsel %vm88, %v844, 0
  %v859 = vsel %vm88, %v845, 0
  %v862 = vsel %vm88, %v846, 0
  %864 = vmatpush.msra.mxu0 0.0
  %865 = vmatpush.msra.mxu0 0.0
  %866 = vmatpush.msra.mxu0 0.0
  %867 = vmatpush.msra.mxu0 0.0
  %868 = vmatpush.msra.mxu0 0.0
  %869 = vmatpush.msra.mxu0 0.0
  %870 = vmatpush.msra.mxu0 0.0
  %871 = vmatpush.msra.mxu0 0.0
  %872 = vmatpush.msra.mxu0 0.0
  %873 = vmatpush.msra.mxu0 0.0
  %874 = vmatpush.msra.mxu0 0.0
  %875 = vmatpush.msra.mxu0 0.0
  %876 = vmatpush.msra.mxu0 %v850
  %877 = vmatpush.msra.mxu0 %v849
  %878 = vmatpush.msra.mxu0 %v848
  %879 = vmatpush.msra.mxu0 %v847
  %880 = vmatmul.f32.gmra.mxu0 %v853
  %v881 = vpop.f32.mrf.mxu0
  %v882 = vadd.f32 %v851, %v881
  %883 = vmatmul.f32.gmra.mxu0 %v856
  %v884 = vpop.f32.mrf.mxu0
  %v885 = vadd.f32 %v851, %v884
  %886 = vmatmul.f32.gmra.mxu0 %v859
  %v887 = vpop.f32.mrf.mxu0
  %v888 = vadd.f32 %v851, %v887
  %889 = vmatmul.f32.gmra.mxu0 %v862
  %v890 = vpop.f32.mrf.mxu0
  %v891 = vadd.f32 %v851, %v890
  %892 = vdwg.mxu0
  %v893 = vmax.f32 %v882, 0.0
  %v894 = vmax.f32 %v885, 0.0
  %v895 = vmax.f32 %v888, 0.0
  %v896 = vmax.f32 %v891, 0.0
  %v897 = vld [vmem:[%s3 + $0x130] sm:$0xff]
  %v898 = vld [vmem:[%s3 + $0x138] sm:$0xff]
  %v899 = vld [vmem:[%s3 + $0x140] sm:$0xff]
  %v900 = vld [vmem:[%s3 + $0x148] sm:$0xff]
  %v901 = vld [vmem:[%s3 + $0x150] sm:$0xff]
  %v902 = vld [vmem:[%s3 + $0x158] sm:$0xff]
  %v903 = vld [vmem:[%s3 + $0x160] sm:$0xff]
  %v904 = vld [vmem:[%s3 + $0x168] sm:$0xff]
  %v905 = vperm.slane %v21, 4
  %vm906 = vcmask 523264
  %v908 = vsel %vm906, %v893, 0
  %v911 = vsel %vm906, %v894, 0
  %v914 = vsel %vm906, %v895, 0
  %v917 = vsel %vm906, %v896, 0
  %919 = vmatpush.msra.mxu0 0.0
  %920 = vmatpush.msra.mxu0 0.0
  %921 = vmatpush.msra.mxu0 0.0
  %922 = vmatpush.msra.mxu0 0.0
  %923 = vmatpush.msra.mxu0 0.0
  %924 = vmatpush.msra.mxu0 0.0
  %925 = vmatpush.msra.mxu0 0.0
  %926 = vmatpush.msra.mxu0 0.0
  %927 = vmatpush.msra.mxu0 %v904
  %928 = vmatpush.msra.mxu0 %v903
  %929 = vmatpush.msra.mxu0 %v902
  %930 = vmatpush.msra.mxu0 %v901
  %931 = vmatpush.msra.mxu0 %v900
  %932 = vmatpush.msra.mxu0 %v899
  %933 = vmatpush.msra.mxu0 %v898
  %934 = vmatpush.msra.mxu0 %v897
  %935 = vmatmul.f32.gmra.mxu0 %v908
  %v936 = vpop.f32.mrf.mxu0
  %v937 = vadd.f32 %v905, %v936
  %938 = vmatmul.f32.gmra.mxu0 %v911
  %v939 = vpop.f32.mrf.mxu0
  %v940 = vadd.f32 %v905, %v939
  %941 = vmatmul.f32.gmra.mxu0 %v914
  %v942 = vpop.f32.mrf.mxu0
  %v943 = vadd.f32 %v905, %v942
  %944 = vmatmul.f32.gmra.mxu0 %v917
  %v945 = vpop.f32.mrf.mxu0
  %v946 = vadd.f32 %v905, %v945
  %947 = vdwg.mxu0
  %v948 = vadd.f32 %v843, %v937
  %v949 = vadd.f32 %v844, %v940
  %v950 = vadd.f32 %v845, %v943
  %v951 = vadd.f32 %v846, %v946
  %v952 = vsel %vm88, %v948, 0.0
  %953 = vadd.xlane.f32.xlu0 %v952
  %v954 = vpop.xlane.xlu0 %953
  %v955 = vsel %vm88, %v949, 0.0
  %956 = vadd.xlane.f32.xlu0 %v955
  %v957 = vpop.xlane.xlu0 %956
  %v958 = vsel %vm88, %v950, 0.0
  %959 = vadd.xlane.f32.xlu0 %v958
  %v960 = vpop.xlane.xlu0 %959
  %v961 = vsel %vm88, %v951, 0.0
  %962 = vadd.xlane.f32.xlu0 %v961
  %v963 = vpop.xlane.xlu0 %962
  %v964 = vmul.f32 %v954, %v760
  %v965 = vmul.f32 %v957, %v760
  %v966 = vmul.f32 %v960, %v760
  %v967 = vmul.f32 %v963, %v760
  %v968 = vsub.f32 %v948, %v964
  %v969 = vsub.f32 %v949, %v965
  %v970 = vsub.f32 %v950, %v966
  %v971 = vsub.f32 %v951, %v967
  %v972 = vmul.f32 %v968, %v968
  %v973 = vmul.f32 %v969, %v969
  %v974 = vmul.f32 %v970, %v970
  %v975 = vmul.f32 %v971, %v971
  %v976 = vsel %vm88, %v972, 0.0
  %977 = vadd.xlane.f32.xlu0 %v976
  %v978 = vpop.xlane.xlu0 %977
  %v979 = vsel %vm88, %v973, 0.0
  %980 = vadd.xlane.f32.xlu0 %v979
  %v981 = vpop.xlane.xlu0 %980
  %v982 = vsel %vm88, %v974, 0.0
  %983 = vadd.xlane.f32.xlu0 %v982
  %v984 = vpop.xlane.xlu0 %983
  %v985 = vsel %vm88, %v975, 0.0
  %986 = vadd.xlane.f32.xlu0 %v985
  %v987 = vpop.xlane.xlu0 %986
  %v988 = vmul.f32 %v978, %v760
  %v989 = vmul.f32 %v981, %v760
  %v990 = vmul.f32 %v984, %v760
  %v991 = vmul.f32 %v987, %v760
  %v992 = vadd.f32 %v988, 1e-05
  %v993 = vadd.f32 %v989, 1e-05
  %v994 = vadd.f32 %v990, 1e-05
  %v995 = vadd.f32 %v991, 1e-05
  %v996 = vrsqrt.pop %v992
  %v997 = vmul.f32 %v996, %v992
  %v998 = vmul.f32 %v997, %v996
  %v999 = vmul.f32 0.5, %v998
  %v1000 = vsub.f32 1.5, %v999
  %v1001 = vmul.f32 %v996, %v1000
  %vm1002 = vweird.f32 %v992
  %vm1003 = vweird.f32 %v996
  %vm1004 = vmor %vm1002, %vm1003
  %v1005 = vsel %vm1004, %v996, %v1001
  %v1006 = vrsqrt.pop %v993
  %v1007 = vmul.f32 %v1006, %v993
  %v1008 = vmul.f32 %v1007, %v1006
  %v1009 = vmul.f32 0.5, %v1008
  %v1010 = vsub.f32 1.5, %v1009
  %v1011 = vmul.f32 %v1006, %v1010
  %vm1012 = vweird.f32 %v993
  %vm1013 = vweird.f32 %v1006
  %vm1014 = vmor %vm1012, %vm1013
  %v1015 = vsel %vm1014, %v1006, %v1011
  %v1016 = vrsqrt.pop %v994
  %v1017 = vmul.f32 %v1016, %v994
  %v1018 = vmul.f32 %v1017, %v1016
  %v1019 = vmul.f32 0.5, %v1018
  %v1020 = vsub.f32 1.5, %v1019
  %v1021 = vmul.f32 %v1016, %v1020
  %vm1022 = vweird.f32 %v994
  %vm1023 = vweird.f32 %v1016
  %vm1024 = vmor %vm1022, %vm1023
  %v1025 = vsel %vm1024, %v1016, %v1021
  %v1026 = vrsqrt.pop %v995
  %v1027 = vmul.f32 %v1026, %v995
  %v1028 = vmul.f32 %v1027, %v1026
  %v1029 = vmul.f32 0.5, %v1028
  %v1030 = vsub.f32 1.5, %v1029
  %v1031 = vmul.f32 %v1026, %v1030
  %vm1032 = vweird.f32 %v995
  %vm1033 = vweird.f32 %v1026
  %vm1034 = vmor %vm1032, %vm1033
  %v1035 = vsel %vm1034, %v1026, %v1031
  %v1036 = vmul.f32 %v968, %v1005
  %v1037 = vmul.f32 %v969, %v1015
  %v1038 = vmul.f32 %v970, %v1025
  %v1039 = vmul.f32 %v971, %v1035
  %v1040 = vperm.slane %v21, 1
  %v1041 = vmul.f32 %v1036, %v1040
  %v1042 = vmul.f32 %v1037, %v1040
  %v1043 = vmul.f32 %v1038, %v1040
  %v1044 = vmul.f32 %v1039, %v1040
  %v1045 = vperm.slane %v21, 2
  %v1046 = vadd.f32 %v1041, %v1045
  %v1047 = vadd.f32 %v1042, %v1045
  %v1048 = vadd.f32 %v1043, %v1045
  %v1049 = vadd.f32 %v1044, %v1045
  %v1050 = vperm.slane %v22, 3
  %v1051 = vadd.f32 %v1050, 0.0
  %v1052 = vld [vmem:[%s3 + $0x170] sm:$0xff]
  %v1053 = vld [vmem:[%s3 + $0x178] sm:$0xff]
  %v1054 = vld [vmem:[%s3 + $0x180] sm:$0xff]
  %v1055 = vld [vmem:[%s3 + $0x188] sm:$0xff]
  %v1056 = vperm.slane %v21, 5
  %v1058 = vsel %vm88, %v1046, 0
  %v1061 = vsel %vm88, %v1047, 0
  %v1064 = vsel %vm88, %v1048, 0
  %v1067 = vsel %vm88, %v1049, 0
  %1069 = vmatpush.msra.mxu0 0.0
  %1070 = vmatpush.msra.mxu0 0.0
  %1071 = vmatpush.msra.mxu0 0.0
  %1072 = vmatpush.msra.mxu0 0.0
  %1073 = vmatpush.msra.mxu0 0.0
  %1074 = vmatpush.msra.mxu0 0.0
  %1075 = vmatpush.msra.mxu0 0.0
  %1076 = vmatpush.msra.mxu0 0.0
  %1077 = vmatpush.msra.mxu0 0.0
  %1078 = vmatpush.msra.mxu0 0.0
  %1079 = vmatpush.msra.mxu0 0.0
  %1080 = vmatpush.msra.mxu0 0.0
  %1081 = vmatpush.msra.mxu0 %v1055
  %1082 = vmatpush.msra.mxu0 %v1054
  %1083 = vmatpush.msra.mxu0 %v1053
  %1084 = vmatpush.msra.mxu0 %v1052
  %1085 = vmatmul.f32.gmra.mxu0 %v1058
  %v1086 = vpop.f32.mrf.mxu0
  %v1087 = vadd.f32 %v1056, %v1086
  %1088 = vmatmul.f32.gmra.mxu0 %v1061
  %v1089 = vpop.f32.mrf.mxu0
  %v1090 = vadd.f32 %v1056, %v1089
  %1091 = vmatmul.f32.gmra.mxu0 %v1064
  %v1092 = vpop.f32.mrf.mxu0
  %v1093 = vadd.f32 %v1056, %v1092
  %1094 = vmatmul.f32.gmra.mxu0 %v1067
  %v1095 = vpop.f32.mrf.mxu0
  %v1096 = vadd.f32 %v1056, %v1095
  %1097 = vdwg.mxu0
  %v1098 = vld [vmem:[%s3 + $0x190] sm:$0xff]
  %v1099 = vld [vmem:[%s3 + $0x198] sm:$0xff]
  %v1100 = vld [vmem:[%s3 + $0x1a0] sm:$0xff]
  %v1101 = vld [vmem:[%s3 + $0x1a8] sm:$0xff]
  %v1102 = vperm.slane %v21, 6
  %1103 = vmatpush.msra.mxu0 0.0
  %1104 = vmatpush.msra.mxu0 0.0
  %1105 = vmatpush.msra.mxu0 0.0
  %1106 = vmatpush.msra.mxu0 0.0
  %1107 = vmatpush.msra.mxu0 0.0
  %1108 = vmatpush.msra.mxu0 0.0
  %1109 = vmatpush.msra.mxu0 0.0
  %1110 = vmatpush.msra.mxu0 0.0
  %1111 = vmatpush.msra.mxu0 0.0
  %1112 = vmatpush.msra.mxu0 0.0
  %1113 = vmatpush.msra.mxu0 0.0
  %1114 = vmatpush.msra.mxu0 0.0
  %1115 = vmatpush.msra.mxu0 %v1101
  %1116 = vmatpush.msra.mxu0 %v1100
  %1117 = vmatpush.msra.mxu0 %v1099
  %1118 = vmatpush.msra.mxu0 %v1098
  %1119 = vmatmul.f32.gmra.mxu0 %v1058
  %v1120 = vpop.f32.mrf.mxu0
  %v1121 = vadd.f32 %v1102, %v1120
  %1122 = vmatmul.f32.gmra.mxu0 %v1061
  %v1123 = vpop.f32.mrf.mxu0
  %v1124 = vadd.f32 %v1102, %v1123
  %1125 = vmatmul.f32.gmra.mxu0 %v1064
  %v1126 = vpop.f32.mrf.mxu0
  %v1127 = vadd.f32 %v1102, %v1126
  %1128 = vmatmul.f32.gmra.mxu0 %v1067
  %v1129 = vpop.f32.mrf.mxu0
  %v1130 = vadd.f32 %v1102, %v1129
  %1131 = vdwg.mxu0
  %v1132 = vld [vmem:[%s3 + $0x1b0] sm:$0xff]
  %v1133 = vld [vmem:[%s3 + $0x1b8] sm:$0xff]
  %v1134 = vld [vmem:[%s3 + $0x1c0] sm:$0xff]
  %v1135 = vld [vmem:[%s3 + $0x1c8] sm:$0xff]
  %v1136 = vperm.slane %v21, 7
  %1137 = vmatpush.msra.mxu0 0.0
  %1138 = vmatpush.msra.mxu0 0.0
  %1139 = vmatpush.msra.mxu0 0.0
  %1140 = vmatpush.msra.mxu0 0.0
  %1141 = vmatpush.msra.mxu0 0.0
  %1142 = vmatpush.msra.mxu0 0.0
  %1143 = vmatpush.msra.mxu0 0.0
  %1144 = vmatpush.msra.mxu0 0.0
  %1145 = vmatpush.msra.mxu0 0.0
  %1146 = vmatpush.msra.mxu0 0.0
  %1147 = vmatpush.msra.mxu0 0.0
  %1148 = vmatpush.msra.mxu0 0.0
  %1149 = vmatpush.msra.mxu0 %v1135
  %1150 = vmatpush.msra.mxu0 %v1134
  %1151 = vmatpush.msra.mxu0 %v1133
  %1152 = vmatpush.msra.mxu0 %v1132
  %1153 = vmatmul.f32.gmra.mxu0 %v1058
  %v1154 = vpop.f32.mrf.mxu0
  %v1155 = vadd.f32 %v1136, %v1154
  %1156 = vmatmul.f32.gmra.mxu0 %v1061
  %v1157 = vpop.f32.mrf.mxu0
  %v1158 = vadd.f32 %v1136, %v1157
  %1159 = vmatmul.f32.gmra.mxu0 %v1064
  %v1160 = vpop.f32.mrf.mxu0
  %v1161 = vadd.f32 %v1136, %v1160
  %1162 = vmatmul.f32.gmra.mxu0 %v1067
  %v1163 = vpop.f32.mrf.mxu0
  %v1164 = vadd.f32 %v1136, %v1163
  %1165 = vdwg.mxu0
  %v1167 = vsel %vm34, %v1087, 0
  %v1170 = vsel %vm34, %v1090, 0
  %v1173 = vsel %vm34, %v1121, 0
  %v1176 = vsel %vm34, %v1124, 0
  %1178 = vmatpush.xpose.msra.mxu0 0.0
  %1179 = vmatpush.xpose.msra.mxu0 0.0
  %1180 = vmatpush.xpose.msra.mxu0 0.0
  %1181 = vmatpush.xpose.msra.mxu0 0.0
  %1182 = vmatpush.xpose.msra.mxu0 0.0
  %1183 = vmatpush.xpose.msra.mxu0 0.0
  %1184 = vmatpush.xpose.msra.mxu0 0.0
  %1185 = vmatpush.xpose.msra.mxu0 0.0
  %1186 = vmatpush.xpose.msra.mxu0 0.0
  %1187 = vmatpush.xpose.msra.mxu0 0.0
  %1188 = vmatpush.xpose.msra.mxu0 0.0
  %1189 = vmatpush.xpose.msra.mxu0 0.0
  %1190 = vmatpush.xpose.msra.mxu0 0.0
  %1191 = vmatpush.xpose.msra.mxu0 0.0
  %1192 = vmatpush.xpose.msra.mxu0 %v1176
  %1193 = vmatpush.xpose.msra.mxu0 %v1173
  %1194 = vmatmul.f32.gmra.mxu0 %v1167
  %v1195 = vpop.f32.mrf.mxu0
  %v1196 = vadd.f32 %v76, %v1195
  %1197 = vmatmul.f32.gmra.mxu0 %v1170
  %v1198 = vpop.f32.mrf.mxu0
  %v1199 = vadd.f32 %v77, %v1198
  %1200 = vdwg.mxu0
  %v1201 = vsel %vm34, %v1196, -inf
  %1202 = vmax.xlane.f32.xlu0 %v1201
  %v1203 = vpop.xlane.xlu0 %1202
  %v1204 = vsel %vm34, %v1199, -inf
  %1205 = vmax.xlane.f32.xlu0 %v1204
  %v1206 = vpop.xlane.xlu0 %1205
  %v1207 = vsub.f32 %v1196, %v1203
  %v1208 = vsub.f32 %v1199, %v1206
  %v1209 = vmul.f32 %v1207, 1.442695
  %v1210 = vpow.pop %v1209
  %v1211 = vmul.f32 %v1208, 1.442695
  %v1212 = vpow.pop %v1211
  %v1213 = vsel %vm34, %v1210, 0.0
  %1214 = vadd.xlane.f32.xlu0 %v1213
  %v1215 = vpop.xlane.xlu0 %1214
  %v1216 = vsel %vm34, %v1212, 0.0
  %1217 = vadd.xlane.f32.xlu0 %v1216
  %v1218 = vpop.xlane.xlu0 %1217
  %v1219 = vrcp.pop %v1215
  %v1220 = vrcp.pop %v1218
  %v1221 = vmul.f32 %v1210, %v1219
  %v1222 = vmul.f32 %v1212, %v1220
  %v1224 = vsel %vm34, %v1221, 0
  %v1227 = vsel %vm34, %v1222, 0
  %1229 = vmatpush.msra.mxu0 0.0
  %1230 = vmatpush.msra.mxu0 0.0
  %1231 = vmatpush.msra.mxu0 0.0
  %1232 = vmatpush.msra.mxu0 0.0
  %1233 = vmatpush.msra.mxu0 0.0
  %1234 = vmatpush.msra.mxu0 0.0
  %1235 = vmatpush.msra.mxu0 0.0
  %1236 = vmatpush.msra.mxu0 0.0
  %1237 = vmatpush.msra.mxu0 0.0
  %1238 = vmatpush.msra.mxu0 0.0
  %1239 = vmatpush.msra.mxu0 0.0
  %1240 = vmatpush.msra.mxu0 0.0
  %1241 = vmatpush.msra.mxu0 0.0
  %1242 = vmatpush.msra.mxu0 0.0
  %1243 = vmatpush.msra.mxu0 %v1158
  %1244 = vmatpush.msra.mxu0 %v1155
  %1245 = vmatmul.f32.gmra.mxu0 %v1224
  %v1246 = vpop.f32.mrf.mxu0
  %v1247 = vadd.f32 0.0, %v1246
  %1248 = vmatmul.f32.gmra.mxu0 %v1227
  %v1249 = vpop.f32.mrf.mxu0
  %v1250 = vadd.f32 0.0, %v1249
  %1251 = vdwg.mxu0
  %v1253 = vsel %vm34, %v1093, 0
  %v1256 = vsel %vm34, %v1096, 0
  %v1259 = vsel %vm34, %v1127, 0
  %v1262 = vsel %vm34, %v1130, 0
  %1264 = vmatpush.xpose.msra.mxu0 0.0
  %1265 = vmatpush.xpose.msra.mxu0 0.0
  %1266 = vmatpush.xpose.msra.mxu0 0.0
  %1267 = vmatpush.xpose.msra.mxu0 0.0
  %1268 = vmatpush.xpose.msra.mxu0 0.0
  %1269 = vmatpush.xpose.msra.mxu0 0.0
  %1270 = vmatpush.xpose.msra.mxu0 0.0
  %1271 = vmatpush.xpose.msra.mxu0 0.0
  %1272 = vmatpush.xpose.msra.mxu0 0.0
  %1273 = vmatpush.xpose.msra.mxu0 0.0
  %1274 = vmatpush.xpose.msra.mxu0 0.0
  %1275 = vmatpush.xpose.msra.mxu0 0.0
  %1276 = vmatpush.xpose.msra.mxu0 0.0
  %1277 = vmatpush.xpose.msra.mxu0 0.0
  %1278 = vmatpush.xpose.msra.mxu0 %v1262
  %1279 = vmatpush.xpose.msra.mxu0 %v1259
  %1280 = vmatmul.f32.gmra.mxu0 %v1253
  %v1281 = vpop.f32.mrf.mxu0
  %v1282 = vadd.f32 %v79, %v1281
  %1283 = vmatmul.f32.gmra.mxu0 %v1256
  %v1284 = vpop.f32.mrf.mxu0
  %v1285 = vadd.f32 %v80, %v1284
  %1286 = vdwg.mxu0
  %v1287 = vsel %vm34, %v1282, -inf
  %1288 = vmax.xlane.f32.xlu0 %v1287
  %v1289 = vpop.xlane.xlu0 %1288
  %v1290 = vsel %vm34, %v1285, -inf
  %1291 = vmax.xlane.f32.xlu0 %v1290
  %v1292 = vpop.xlane.xlu0 %1291
  %v1293 = vsub.f32 %v1282, %v1289
  %v1294 = vsub.f32 %v1285, %v1292
  %v1295 = vmul.f32 %v1293, 1.442695
  %v1296 = vpow.pop %v1295
  %v1297 = vmul.f32 %v1294, 1.442695
  %v1298 = vpow.pop %v1297
  %v1299 = vsel %vm34, %v1296, 0.0
  %1300 = vadd.xlane.f32.xlu0 %v1299
  %v1301 = vpop.xlane.xlu0 %1300
  %v1302 = vsel %vm34, %v1298, 0.0
  %1303 = vadd.xlane.f32.xlu0 %v1302
  %v1304 = vpop.xlane.xlu0 %1303
  %v1305 = vrcp.pop %v1301
  %v1306 = vrcp.pop %v1304
  %v1307 = vmul.f32 %v1296, %v1305
  %v1308 = vmul.f32 %v1298, %v1306
  %v1310 = vsel %vm34, %v1307, 0
  %v1313 = vsel %vm34, %v1308, 0
  %1315 = vmatpush.msra.mxu0 0.0
  %1316 = vmatpush.msra.mxu0 0.0
  %1317 = vmatpush.msra.mxu0 0.0
  %1318 = vmatpush.msra.mxu0 0.0
  %1319 = vmatpush.msra.mxu0 0.0
  %1320 = vmatpush.msra.mxu0 0.0
  %1321 = vmatpush.msra.mxu0 0.0
  %1322 = vmatpush.msra.mxu0 0.0
  %1323 = vmatpush.msra.mxu0 0.0
  %1324 = vmatpush.msra.mxu0 0.0
  %1325 = vmatpush.msra.mxu0 0.0
  %1326 = vmatpush.msra.mxu0 0.0
  %1327 = vmatpush.msra.mxu0 0.0
  %1328 = vmatpush.msra.mxu0 0.0
  %1329 = vmatpush.msra.mxu0 %v1164
  %1330 = vmatpush.msra.mxu0 %v1161
  %1331 = vmatmul.f32.gmra.mxu0 %v1310
  %v1332 = vpop.f32.mrf.mxu0
  %v1333 = vadd.f32 0.0, %v1332
  %1334 = vmatmul.f32.gmra.mxu0 %v1313
  %v1335 = vpop.f32.mrf.mxu0
  %v1336 = vadd.f32 0.0, %v1335
  %1337 = vdwg.mxu0
  %v1338 = vld [vmem:[%s3 + $0x1d0] sm:$0xff]
  %v1339 = vld [vmem:[%s3 + $0x1d8] sm:$0xff]
  %v1341 = vsel %vm34, %v1247, 0
  %v1344 = vsel %vm34, %v1250, 0
  %v1347 = vsel %vm34, %v1333, 0
  %v1350 = vsel %vm34, %v1336, 0
  %1352 = vmatpush.msra.mxu0 0.0
  %1353 = vmatpush.msra.mxu0 0.0
  %1354 = vmatpush.msra.mxu0 0.0
  %1355 = vmatpush.msra.mxu0 0.0
  %1356 = vmatpush.msra.mxu0 0.0
  %1357 = vmatpush.msra.mxu0 0.0
  %1358 = vmatpush.msra.mxu0 0.0
  %1359 = vmatpush.msra.mxu0 0.0
  %1360 = vmatpush.msra.mxu0 0.0
  %1361 = vmatpush.msra.mxu0 0.0
  %1362 = vmatpush.msra.mxu0 0.0
  %1363 = vmatpush.msra.mxu0 0.0
  %1364 = vmatpush.msra.mxu0 0.0
  %1365 = vmatpush.msra.mxu0 0.0
  %1366 = vmatpush.msra.mxu0 %v1339
  %1367 = vmatpush.msra.mxu0 %v1338
  %1368 = vmatmul.f32.gmra.mxu0 %v1341
  %v1369 = vpop.f32.mrf.mxu0
  %v1370 = vadd.f32 0.0, %v1369
  %1371 = vmatmul.f32.gmra.mxu0 %v1344
  %v1372 = vpop.f32.mrf.mxu0
  %v1373 = vadd.f32 0.0, %v1372
  %1374 = vmatmul.f32.gmra.mxu0 %v1347
  %v1375 = vpop.f32.mrf.mxu0
  %v1376 = vadd.f32 0.0, %v1375
  %1377 = vmatmul.f32.gmra.mxu0 %v1350
  %v1378 = vpop.f32.mrf.mxu0
  %v1379 = vadd.f32 0.0, %v1378
  %1380 = vdwg.mxu0
  %v1381 = vadd.f32 %v1051, %v1370
  %v1382 = vadd.f32 %v1051, %v1373
  %v1383 = vadd.f32 %v1051, %v1376
  %v1384 = vadd.f32 %v1051, %v1379
  %v1385 = vld [vmem:[%s3 + $0x1e0] sm:$0xff]
  %v1386 = vld [vmem:[%s3 + $0x1e8] sm:$0xff]
  %v1387 = vld [vmem:[%s3 + $0x1f0] sm:$0xff]
  %v1388 = vld [vmem:[%s3 + $0x1f8] sm:$0xff]
  %v1389 = vperm.slane %v22, 0
  %1390 = vmatpush.msra.mxu0 0.0
  %1391 = vmatpush.msra.mxu0 0.0
  %1392 = vmatpush.msra.mxu0 0.0
  %1393 = vmatpush.msra.mxu0 0.0
  %1394 = vmatpush.msra.mxu0 0.0
  %1395 = vmatpush.msra.mxu0 0.0
  %1396 = vmatpush.msra.mxu0 0.0
  %1397 = vmatpush.msra.mxu0 0.0
  %1398 = vmatpush.msra.mxu0 0.0
  %1399 = vmatpush.msra.mxu0 0.0
  %1400 = vmatpush.msra.mxu0 0.0
  %1401 = vmatpush.msra.mxu0 0.0
  %1402 = vmatpush.msra.mxu0 %v1388
  %1403 = vmatpush.msra.mxu0 %v1387
  %1404 = vmatpush.msra.mxu0 %v1386
  %1405 = vmatpush.msra.mxu0 %v1385
  %1406 = vmatmul.f32.gmra.mxu0 %v1058
  %v1407 = vpop.f32.mrf.mxu0
  %v1408 = vadd.f32 %v1389, %v1407
  %1409 = vmatmul.f32.gmra.mxu0 %v1061
  %v1410 = vpop.f32.mrf.mxu0
  %v1411 = vadd.f32 %v1389, %v1410
  %1412 = vmatmul.f32.gmra.mxu0 %v1064
  %v1413 = vpop.f32.mrf.mxu0
  %v1414 = vadd.f32 %v1389, %v1413
  %1415 = vmatmul.f32.gmra.mxu0 %v1067
  %v1416 = vpop.f32.mrf.mxu0
  %v1417 = vadd.f32 %v1389, %v1416
  %1418 = vdwg.mxu0
  %v1419 = vld [vmem:[%s3 + $0x200] sm:$0xff]
  %v1420 = vld [vmem:[%s3 + $0x208] sm:$0xff]
  %v1421 = vld [vmem:[%s3 + $0x210] sm:$0xff]
  %v1422 = vld [vmem:[%s3 + $0x218] sm:$0xff]
  %v1423 = vperm.slane %v22, 1
  %1424 = vmatpush.msra.mxu0 0.0
  %1425 = vmatpush.msra.mxu0 0.0
  %1426 = vmatpush.msra.mxu0 0.0
  %1427 = vmatpush.msra.mxu0 0.0
  %1428 = vmatpush.msra.mxu0 0.0
  %1429 = vmatpush.msra.mxu0 0.0
  %1430 = vmatpush.msra.mxu0 0.0
  %1431 = vmatpush.msra.mxu0 0.0
  %1432 = vmatpush.msra.mxu0 0.0
  %1433 = vmatpush.msra.mxu0 0.0
  %1434 = vmatpush.msra.mxu0 0.0
  %1435 = vmatpush.msra.mxu0 0.0
  %1436 = vmatpush.msra.mxu0 %v1422
  %1437 = vmatpush.msra.mxu0 %v1421
  %1438 = vmatpush.msra.mxu0 %v1420
  %1439 = vmatpush.msra.mxu0 %v1419
  %1440 = vmatmul.f32.gmra.mxu0 %v1058
  %v1441 = vpop.f32.mrf.mxu0
  %v1442 = vadd.f32 %v1423, %v1441
  %1443 = vmatmul.f32.gmra.mxu0 %v1061
  %v1444 = vpop.f32.mrf.mxu0
  %v1445 = vadd.f32 %v1423, %v1444
  %1446 = vmatmul.f32.gmra.mxu0 %v1064
  %v1447 = vpop.f32.mrf.mxu0
  %v1448 = vadd.f32 %v1423, %v1447
  %1449 = vmatmul.f32.gmra.mxu0 %v1067
  %v1450 = vpop.f32.mrf.mxu0
  %v1451 = vadd.f32 %v1423, %v1450
  %1452 = vdwg.mxu0
  %v1453 = vld [vmem:[%s3 + $0x220] sm:$0xff]
  %v1454 = vld [vmem:[%s3 + $0x228] sm:$0xff]
  %v1455 = vld [vmem:[%s3 + $0x230] sm:$0xff]
  %v1456 = vld [vmem:[%s3 + $0x238] sm:$0xff]
  %v1457 = vperm.slane %v22, 2
  %1458 = vmatpush.msra.mxu0 0.0
  %1459 = vmatpush.msra.mxu0 0.0
  %1460 = vmatpush.msra.mxu0 0.0
  %1461 = vmatpush.msra.mxu0 0.0
  %1462 = vmatpush.msra.mxu0 0.0
  %1463 = vmatpush.msra.mxu0 0.0
  %1464 = vmatpush.msra.mxu0 0.0
  %1465 = vmatpush.msra.mxu0 0.0
  %1466 = vmatpush.msra.mxu0 0.0
  %1467 = vmatpush.msra.mxu0 0.0
  %1468 = vmatpush.msra.mxu0 0.0
  %1469 = vmatpush.msra.mxu0 0.0
  %1470 = vmatpush.msra.mxu0 %v1456
  %1471 = vmatpush.msra.mxu0 %v1455
  %1472 = vmatpush.msra.mxu0 %v1454
  %1473 = vmatpush.msra.mxu0 %v1453
  %1474 = vmatmul.f32.gmra.mxu0 %v1058
  %v1475 = vpop.f32.mrf.mxu0
  %v1476 = vadd.f32 %v1457, %v1475
  %1477 = vmatmul.f32.gmra.mxu0 %v1061
  %v1478 = vpop.f32.mrf.mxu0
  %v1479 = vadd.f32 %v1457, %v1478
  %1480 = vmatmul.f32.gmra.mxu0 %v1064
  %v1481 = vpop.f32.mrf.mxu0
  %v1482 = vadd.f32 %v1457, %v1481
  %1483 = vmatmul.f32.gmra.mxu0 %v1067
  %v1484 = vpop.f32.mrf.mxu0
  %v1485 = vadd.f32 %v1457, %v1484
  %1486 = vdwg.mxu0
  %v1488 = vsel %vm34, %v1408, 0
  %v1491 = vsel %vm34, %v1411, 0
  %v1494 = vsel %vm34, %v1442, 0
  %v1497 = vsel %vm34, %v1445, 0
  %1499 = vmatpush.xpose.msra.mxu0 0.0
  %1500 = vmatpush.xpose.msra.mxu0 0.0
  %1501 = vmatpush.xpose.msra.mxu0 0.0
  %1502 = vmatpush.xpose.msra.mxu0 0.0
  %1503 = vmatpush.xpose.msra.mxu0 0.0
  %1504 = vmatpush.xpose.msra.mxu0 0.0
  %1505 = vmatpush.xpose.msra.mxu0 0.0
  %1506 = vmatpush.xpose.msra.mxu0 0.0
  %1507 = vmatpush.xpose.msra.mxu0 0.0
  %1508 = vmatpush.xpose.msra.mxu0 0.0
  %1509 = vmatpush.xpose.msra.mxu0 0.0
  %1510 = vmatpush.xpose.msra.mxu0 0.0
  %1511 = vmatpush.xpose.msra.mxu0 0.0
  %1512 = vmatpush.xpose.msra.mxu0 0.0
  %1513 = vmatpush.xpose.msra.mxu0 %v1497
  %1514 = vmatpush.xpose.msra.mxu0 %v1494
  %1515 = vmatmul.f32.gmra.mxu0 %v1488
  %v1516 = vpop.f32.mrf.mxu0
  %v1517 = vadd.f32 %v76, %v1516
  %1518 = vmatmul.f32.gmra.mxu0 %v1491
  %v1519 = vpop.f32.mrf.mxu0
  %v1520 = vadd.f32 %v77, %v1519
  %1521 = vdwg.mxu0
  %v1522 = vsel %vm34, %v1517, -inf
  %1523 = vmax.xlane.f32.xlu0 %v1522
  %v1524 = vpop.xlane.xlu0 %1523
  %v1525 = vsel %vm34, %v1520, -inf
  %1526 = vmax.xlane.f32.xlu0 %v1525
  %v1527 = vpop.xlane.xlu0 %1526
  %v1528 = vsub.f32 %v1517, %v1524
  %v1529 = vsub.f32 %v1520, %v1527
  %v1530 = vmul.f32 %v1528, 1.442695
  %v1531 = vpow.pop %v1530
  %v1532 = vmul.f32 %v1529, 1.442695
  %v1533 = vpow.pop %v1532
  %v1534 = vsel %vm34, %v1531, 0.0
  %1535 = vadd.xlane.f32.xlu0 %v1534
  %v1536 = vpop.xlane.xlu0 %1535
  %v1537 = vsel %vm34, %v1533, 0.0
  %1538 = vadd.xlane.f32.xlu0 %v1537
  %v1539 = vpop.xlane.xlu0 %1538
  %v1540 = vrcp.pop %v1536
  %v1541 = vrcp.pop %v1539
  %v1542 = vmul.f32 %v1531, %v1540
  %v1543 = vmul.f32 %v1533, %v1541
  %v1545 = vsel %vm34, %v1542, 0
  %v1548 = vsel %vm34, %v1543, 0
  %1550 = vmatpush.msra.mxu0 0.0
  %1551 = vmatpush.msra.mxu0 0.0
  %1552 = vmatpush.msra.mxu0 0.0
  %1553 = vmatpush.msra.mxu0 0.0
  %1554 = vmatpush.msra.mxu0 0.0
  %1555 = vmatpush.msra.mxu0 0.0
  %1556 = vmatpush.msra.mxu0 0.0
  %1557 = vmatpush.msra.mxu0 0.0
  %1558 = vmatpush.msra.mxu0 0.0
  %1559 = vmatpush.msra.mxu0 0.0
  %1560 = vmatpush.msra.mxu0 0.0
  %1561 = vmatpush.msra.mxu0 0.0
  %1562 = vmatpush.msra.mxu0 0.0
  %1563 = vmatpush.msra.mxu0 0.0
  %1564 = vmatpush.msra.mxu0 %v1479
  %1565 = vmatpush.msra.mxu0 %v1476
  %1566 = vmatmul.f32.gmra.mxu0 %v1545
  %v1567 = vpop.f32.mrf.mxu0
  %v1568 = vadd.f32 0.0, %v1567
  %1569 = vmatmul.f32.gmra.mxu0 %v1548
  %v1570 = vpop.f32.mrf.mxu0
  %v1571 = vadd.f32 0.0, %v1570
  %1572 = vdwg.mxu0
  %v1574 = vsel %vm34, %v1414, 0
  %v1577 = vsel %vm34, %v1417, 0
  %v1580 = vsel %vm34, %v1448, 0
  %v1583 = vsel %vm34, %v1451, 0
  %1585 = vmatpush.xpose.msra.mxu0 0.0
  %1586 = vmatpush.xpose.msra.mxu0 0.0
  %1587 = vmatpush.xpose.msra.mxu0 0.0
  %1588 = vmatpush.xpose.msra.mxu0 0.0
  %1589 = vmatpush.xpose.msra.mxu0 0.0
  %1590 = vmatpush.xpose.msra.mxu0 0.0
  %1591 = vmatpush.xpose.msra.mxu0 0.0
  %1592 = vmatpush.xpose.msra.mxu0 0.0
  %1593 = vmatpush.xpose.msra.mxu0 0.0
  %1594 = vmatpush.xpose.msra.mxu0 0.0
  %1595 = vmatpush.xpose.msra.mxu0 0.0
  %1596 = vmatpush.xpose.msra.mxu0 0.0
  %1597 = vmatpush.xpose.msra.mxu0 0.0
  %1598 = vmatpush.xpose.msra.mxu0 0.0
  %1599 = vmatpush.xpose.msra.mxu0 %v1583
  %1600 = vmatpush.xpose.msra.mxu0 %v1580
  %1601 = vmatmul.f32.gmra.mxu0 %v1574
  %v1602 = vpop.f32.mrf.mxu0
  %v1603 = vadd.f32 %v79, %v1602
  %1604 = vmatmul.f32.gmra.mxu0 %v1577
  %v1605 = vpop.f32.mrf.mxu0
  %v1606 = vadd.f32 %v80, %v1605
  %1607 = vdwg.mxu0
  %v1608 = vsel %vm34, %v1603, -inf
  %1609 = vmax.xlane.f32.xlu0 %v1608
  %v1610 = vpop.xlane.xlu0 %1609
  %v1611 = vsel %vm34, %v1606, -inf
  %1612 = vmax.xlane.f32.xlu0 %v1611
  %v1613 = vpop.xlane.xlu0 %1612
  %v1614 = vsub.f32 %v1603, %v1610
  %v1615 = vsub.f32 %v1606, %v1613
  %v1616 = vmul.f32 %v1614, 1.442695
  %v1617 = vpow.pop %v1616
  %v1618 = vmul.f32 %v1615, 1.442695
  %v1619 = vpow.pop %v1618
  %v1620 = vsel %vm34, %v1617, 0.0
  %1621 = vadd.xlane.f32.xlu0 %v1620
  %v1622 = vpop.xlane.xlu0 %1621
  %v1623 = vsel %vm34, %v1619, 0.0
  %1624 = vadd.xlane.f32.xlu0 %v1623
  %v1625 = vpop.xlane.xlu0 %1624
  %v1626 = vrcp.pop %v1622
  %v1627 = vrcp.pop %v1625
  %v1628 = vmul.f32 %v1617, %v1626
  %v1629 = vmul.f32 %v1619, %v1627
  %v1631 = vsel %vm34, %v1628, 0
  %v1634 = vsel %vm34, %v1629, 0
  %1636 = vmatpush.msra.mxu0 0.0
  %1637 = vmatpush.msra.mxu0 0.0
  %1638 = vmatpush.msra.mxu0 0.0
  %1639 = vmatpush.msra.mxu0 0.0
  %1640 = vmatpush.msra.mxu0 0.0
  %1641 = vmatpush.msra.mxu0 0.0
  %1642 = vmatpush.msra.mxu0 0.0
  %1643 = vmatpush.msra.mxu0 0.0
  %1644 = vmatpush.msra.mxu0 0.0
  %1645 = vmatpush.msra.mxu0 0.0
  %1646 = vmatpush.msra.mxu0 0.0
  %1647 = vmatpush.msra.mxu0 0.0
  %1648 = vmatpush.msra.mxu0 0.0
  %1649 = vmatpush.msra.mxu0 0.0
  %1650 = vmatpush.msra.mxu0 %v1485
  %1651 = vmatpush.msra.mxu0 %v1482
  %1652 = vmatmul.f32.gmra.mxu0 %v1631
  %v1653 = vpop.f32.mrf.mxu0
  %v1654 = vadd.f32 0.0, %v1653
  %1655 = vmatmul.f32.gmra.mxu0 %v1634
  %v1656 = vpop.f32.mrf.mxu0
  %v1657 = vadd.f32 0.0, %v1656
  %1658 = vdwg.mxu0
  %v1659 = vld [vmem:[%s3 + $0x240] sm:$0xff]
  %v1660 = vld [vmem:[%s3 + $0x248] sm:$0xff]
  %v1662 = vsel %vm34, %v1568, 0
  %v1665 = vsel %vm34, %v1571, 0
  %v1668 = vsel %vm34, %v1654, 0
  %v1671 = vsel %vm34, %v1657, 0
  %1673 = vmatpush.msra.mxu0 0.0
  %1674 = vmatpush.msra.mxu0 0.0
  %1675 = vmatpush.msra.mxu0 0.0
  %1676 = vmatpush.msra.mxu0 0.0
  %1677 = vmatpush.msra.mxu0 0.0
  %1678 = vmatpush.msra.mxu0 0.0
  %1679 = vmatpush.msra.mxu0 0.0
  %1680 = vmatpush.msra.mxu0 0.0
  %1681 = vmatpush.msra.mxu0 0.0
  %1682 = vmatpush.msra.mxu0 0.0
  %1683 = vmatpush.msra.mxu0 0.0
  %1684 = vmatpush.msra.mxu0 0.0
  %1685 = vmatpush.msra.mxu0 0.0
  %1686 = vmatpush.msra.mxu0 0.0
  %1687 = vmatpush.msra.mxu0 %v1660
  %1688 = vmatpush.msra.mxu0 %v1659
  %1689 = vmatmul.f32.gmra.mxu0 %v1662
  %v1690 = vpop.f32.mrf.mxu0
  %v1691 = vadd.f32 0.0, %v1690
  %1692 = vmatmul.f32.gmra.mxu0 %v1665
  %v1693 = vpop.f32.mrf.mxu0
  %v1694 = vadd.f32 0.0, %v1693
  %1695 = vmatmul.f32.gmra.mxu0 %v1668
  %v1696 = vpop.f32.mrf.mxu0
  %v1697 = vadd.f32 0.0, %v1696
  %1698 = vmatmul.f32.gmra.mxu0 %v1671
  %v1699 = vpop.f32.mrf.mxu0
  %v1700 = vadd.f32 0.0, %v1699
  %1701 = vdwg.mxu0
  %v1702 = vadd.f32 %v1381, %v1691
  %v1703 = vadd.f32 %v1382, %v1694
  %v1704 = vadd.f32 %v1383, %v1697
  %v1705 = vadd.f32 %v1384, %v1700
  %v1706 = vadd.f32 %v1046, %v1702
  %v1707 = vadd.f32 %v1047, %v1703
  %v1708 = vadd.f32 %v1048, %v1704
  %v1709 = vadd.f32 %v1049, %v1705
  %v1710 = vsel %vm88, %v1706, 0.0
  %1711 = vadd.xlane.f32.xlu0 %v1710
  %v1712 = vpop.xlane.xlu0 %1711
  %v1713 = vsel %vm88, %v1707, 0.0
  %1714 = vadd.xlane.f32.xlu0 %v1713
  %v1715 = vpop.xlane.xlu0 %1714
  %v1716 = vsel %vm88, %v1708, 0.0
  %1717 = vadd.xlane.f32.xlu0 %v1716
  %v1718 = vpop.xlane.xlu0 %1717
  %v1719 = vsel %vm88, %v1709, 0.0
  %1720 = vadd.xlane.f32.xlu0 %v1719
  %v1721 = vpop.xlane.xlu0 %1720
  %v1722 = vmul.f32 %v1712, %v760
  %v1723 = vmul.f32 %v1715, %v760
  %v1724 = vmul.f32 %v1718, %v760
  %v1725 = vmul.f32 %v1721, %v760
  %v1726 = vsub.f32 %v1706, %v1722
  %v1727 = vsub.f32 %v1707, %v1723
  %v1728 = vsub.f32 %v1708, %v1724
  %v1729 = vsub.f32 %v1709, %v1725
  %v1730 = vmul.f32 %v1726, %v1726
  %v1731 = vmul.f32 %v1727, %v1727
  %v1732 = vmul.f32 %v1728, %v1728
  %v1733 = vmul.f32 %v1729, %v1729
  %v1734 = vsel %vm88, %v1730, 0.0
  %1735 = vadd.xlane.f32.xlu0 %v1734
  %v1736 = vpop.xlane.xlu0 %1735
  %v1737 = vsel %vm88, %v1731, 0.0
  %1738 = vadd.xlane.f32.xlu0 %v1737
  %v1739 = vpop.xlane.xlu0 %1738
  %v1740 = vsel %vm88, %v1732, 0.0
  %1741 = vadd.xlane.f32.xlu0 %v1740
  %v1742 = vpop.xlane.xlu0 %1741
  %v1743 = vsel %vm88, %v1733, 0.0
  %1744 = vadd.xlane.f32.xlu0 %v1743
  %v1745 = vpop.xlane.xlu0 %1744
  %v1746 = vmul.f32 %v1736, %v760
  %v1747 = vmul.f32 %v1739, %v760
  %v1748 = vmul.f32 %v1742, %v760
  %v1749 = vmul.f32 %v1745, %v760
  %v1750 = vadd.f32 %v1746, 1e-05
  %v1751 = vadd.f32 %v1747, 1e-05
  %v1752 = vadd.f32 %v1748, 1e-05
  %v1753 = vadd.f32 %v1749, 1e-05
  %v1754 = vrsqrt.pop %v1750
  %v1755 = vmul.f32 %v1754, %v1750
  %v1756 = vmul.f32 %v1755, %v1754
  %v1757 = vmul.f32 0.5, %v1756
  %v1758 = vsub.f32 1.5, %v1757
  %v1759 = vmul.f32 %v1754, %v1758
  %vm1760 = vweird.f32 %v1750
  %vm1761 = vweird.f32 %v1754
  %vm1762 = vmor %vm1760, %vm1761
  %v1763 = vsel %vm1762, %v1754, %v1759
  %v1764 = vrsqrt.pop %v1751
  %v1765 = vmul.f32 %v1764, %v1751
  %v1766 = vmul.f32 %v1765, %v1764
  %v1767 = vmul.f32 0.5, %v1766
  %v1768 = vsub.f32 1.5, %v1767
  %v1769 = vmul.f32 %v1764, %v1768
  %vm1770 = vweird.f32 %v1751
  %vm1771 = vweird.f32 %v1764
  %vm1772 = vmor %vm1770, %vm1771
  %v1773 = vsel %vm1772, %v1764, %v1769
  %v1774 = vrsqrt.pop %v1752
  %v1775 = vmul.f32 %v1774, %v1752
  %v1776 = vmul.f32 %v1775, %v1774
  %v1777 = vmul.f32 0.5, %v1776
  %v1778 = vsub.f32 1.5, %v1777
  %v1779 = vmul.f32 %v1774, %v1778
  %vm1780 = vweird.f32 %v1752
  %vm1781 = vweird.f32 %v1774
  %vm1782 = vmor %vm1780, %vm1781
  %v1783 = vsel %vm1782, %v1774, %v1779
  %v1784 = vrsqrt.pop %v1753
  %v1785 = vmul.f32 %v1784, %v1753
  %v1786 = vmul.f32 %v1785, %v1784
  %v1787 = vmul.f32 0.5, %v1786
  %v1788 = vsub.f32 1.5, %v1787
  %v1789 = vmul.f32 %v1784, %v1788
  %vm1790 = vweird.f32 %v1753
  %vm1791 = vweird.f32 %v1784
  %vm1792 = vmor %vm1790, %vm1791
  %v1793 = vsel %vm1792, %v1784, %v1789
  %v1794 = vmul.f32 %v1726, %v1763
  %v1795 = vmul.f32 %v1727, %v1773
  %v1796 = vmul.f32 %v1728, %v1783
  %v1797 = vmul.f32 %v1729, %v1793
  %v1798 = vperm.slane %v22, 4
  %v1799 = vmul.f32 %v1794, %v1798
  %v1800 = vmul.f32 %v1795, %v1798
  %v1801 = vmul.f32 %v1796, %v1798
  %v1802 = vmul.f32 %v1797, %v1798
  %v1803 = vperm.slane %v22, 5
  %v1804 = vadd.f32 %v1799, %v1803
  %v1805 = vadd.f32 %v1800, %v1803
  %v1806 = vadd.f32 %v1801, %v1803
  %v1807 = vadd.f32 %v1802, %v1803
  %v1808 = vld [vmem:[%s3 + $0x250] sm:$0xff]
  %v1809 = vld [vmem:[%s3 + $0x258] sm:$0xff]
  %v1810 = vld [vmem:[%s3 + $0x260] sm:$0xff]
  %v1811 = vld [vmem:[%s3 + $0x268] sm:$0xff]
  %v1812 = vperm.slane %v23, 0
  %v1814 = vsel %vm88, %v1804, 0
  %v1817 = vsel %vm88, %v1805, 0
  %v1820 = vsel %vm88, %v1806, 0
  %v1823 = vsel %vm88, %v1807, 0
  %1825 = vmatpush.msra.mxu0 0.0
  %1826 = vmatpush.msra.mxu0 0.0
  %1827 = vmatpush.msra.mxu0 0.0
  %1828 = vmatpush.msra.mxu0 0.0
  %1829 = vmatpush.msra.mxu0 0.0
  %1830 = vmatpush.msra.mxu0 0.0
  %1831 = vmatpush.msra.mxu0 0.0
  %1832 = vmatpush.msra.mxu0 0.0
  %1833 = vmatpush.msra.mxu0 0.0
  %1834 = vmatpush.msra.mxu0 0.0
  %1835 = vmatpush.msra.mxu0 0.0
  %1836 = vmatpush.msra.mxu0 0.0
  %1837 = vmatpush.msra.mxu0 %v1811
  %1838 = vmatpush.msra.mxu0 %v1810
  %1839 = vmatpush.msra.mxu0 %v1809
  %1840 = vmatpush.msra.mxu0 %v1808
  %1841 = vmatmul.f32.gmra.mxu0 %v1814
  %v1842 = vpop.f32.mrf.mxu0
  %v1843 = vadd.f32 %v1812, %v1842
  %1844 = vmatmul.f32.gmra.mxu0 %v1817
  %v1845 = vpop.f32.mrf.mxu0
  %v1846 = vadd.f32 %v1812, %v1845
  %1847 = vmatmul.f32.gmra.mxu0 %v1820
  %v1848 = vpop.f32.mrf.mxu0
  %v1849 = vadd.f32 %v1812, %v1848
  %1850 = vmatmul.f32.gmra.mxu0 %v1823
  %v1851 = vpop.f32.mrf.mxu0
  %v1852 = vadd.f32 %v1812, %v1851
  %1853 = vdwg.mxu0
  %v1854 = vmax.f32 %v1843, 0.0
  %v1855 = vmax.f32 %v1846, 0.0
  %v1856 = vmax.f32 %v1849, 0.0
  %v1857 = vmax.f32 %v1852, 0.0
  %v1858 = vld [vmem:[%s3 + $0x270] sm:$0xff]
  %v1859 = vld [vmem:[%s3 + $0x278] sm:$0xff]
  %v1860 = vld [vmem:[%s3 + $0x280] sm:$0xff]
  %v1861 = vld [vmem:[%s3 + $0x288] sm:$0xff]
  %v1862 = vld [vmem:[%s3 + $0x290] sm:$0xff]
  %v1863 = vld [vmem:[%s3 + $0x298] sm:$0xff]
  %v1864 = vld [vmem:[%s3 + $0x2a0] sm:$0xff]
  %v1865 = vld [vmem:[%s3 + $0x2a8] sm:$0xff]
  %v1866 = vperm.slane %v23, 1
  %v1868 = vsel %vm906, %v1854, 0
  %v1871 = vsel %vm906, %v1855, 0
  %v1874 = vsel %vm906, %v1856, 0
  %v1877 = vsel %vm906, %v1857, 0
  %1879 = vmatpush.msra.mxu0 0.0
  %1880 = vmatpush.msra.mxu0 0.0
  %1881 = vmatpush.msra.mxu0 0.0
  %1882 = vmatpush.msra.mxu0 0.0
  %1883 = vmatpush.msra.mxu0 0.0
  %1884 = vmatpush.msra.mxu0 0.0
  %1885 = vmatpush.msra.mxu0 0.0
  %1886 = vmatpush.msra.mxu0 0.0
  %1887 = vmatpush.msra.mxu0 %v1865
  %1888 = vmatpush.msra.mxu0 %v1864
  %1889 = vmatpush.msra.mxu0 %v1863
  %1890 = vmatpush.msra.mxu0 %v1862
  %1891 = vmatpush.msra.mxu0 %v1861
  %1892 = vmatpush.msra.mxu0 %v1860
  %1893 = vmatpush.msra.mxu0 %v1859
  %1894 = vmatpush.msra.mxu0 %v1858
  %1895 = vmatmul.f32.gmra.mxu0 %v1868
  %v1896 = vpop.f32.mrf.mxu0
  %v1897 = vadd.f32 %v1866, %v1896
  %1898 = vmatmul.f32.gmra.mxu0 %v1871
  %v1899 = vpop.f32.mrf.mxu0
  %1900 = vmatmul.f32.gmra.mxu0 %v1874
  %v1901 = vpop.f32.mrf.mxu0
  %v1902 = vadd.f32 %v1866, %v1901
  %1903 = vmatmul.f32.gmra.mxu0 %v1877
  %v1904 = vpop.f32.mrf.mxu0
  %1905 = vdwg.mxu0
  %v1906 = vadd.f32 %v1804, %v1897
  %v1907 = vadd.f32 %v1806, %v1902
  %v1908 = vsel %vm88, %v1906, 0.0
  %1909 = vadd.xlane.f32.xlu0 %v1908
  %v1910 = vpop.xlane.xlu0 %1909
  %v1911 = vsel %vm88, %v1907, 0.0
  %1912 = vadd.xlane.f32.xlu0 %v1911
  %v1913 = vpop.xlane.xlu0 %1912
  %v1914 = vmul.f32 %v1910, %v760
  %v1915 = vmul.f32 %v1913, %v760
  %v1916 = vsub.f32 %v1906, %v1914
  %v1917 = vsub.f32 %v1907, %v1915
  %v1918 = vmul.f32 %v1916, %v1916
  %v1919 = vmul.f32 %v1917, %v1917
  %v1920 = vsel %vm88, %v1918, 0.0
  %1921 = vadd.xlane.f32.xlu0 %v1920
  %v1922 = vpop.xlane.xlu0 %1921
  %v1923 = vsel %vm88, %v1919, 0.0
  %1924 = vadd.xlane.f32.xlu0 %v1923
  %v1925 = vpop.xlane.xlu0 %1924
  %v1926 = vmul.f32 %v1922, %v760
  %v1927 = vmul.f32 %v1925, %v760
  %v1928 = vadd.f32 %v1926, 1e-05
  %v1929 = vadd.f32 %v1927, 1e-05
  %v1930 = vrsqrt.pop %v1928
  %v1931 = vmul.f32 %v1930, %v1928
  %v1932 = vmul.f32 %v1931, %v1930
  %v1933 = vmul.f32 0.5, %v1932
  %v1934 = vsub.f32 1.5, %v1933
  %v1935 = vmul.f32 %v1930, %v1934
  %vm1936 = vweird.f32 %v1928
  %vm1937 = vweird.f32 %v1930
  %vm1938 = vmor %vm1936, %vm1937
  %v1939 = vsel %vm1938, %v1930, %v1935
  %v1940 = vrsqrt.pop %v1929
  %v1941 = vmul.f32 %v1940, %v1929
  %v1942 = vmul.f32 %v1941, %v1940
  %v1943 = vmul.f32 0.5, %v1942
  %v1944 = vsub.f32 1.5, %v1943
  %v1945 = vmul.f32 %v1940, %v1944
  %vm1946 = vweird.f32 %v1929
  %vm1947 = vweird.f32 %v1940
  %vm1948 = vmor %vm1946, %vm1947
  %v1949 = vsel %vm1948, %v1940, %v1945
  %v1950 = vmul.f32 %v1916, %v1939
  %v1951 = vmul.f32 %v1917, %v1949
  %v1952 = vperm.slane %v22, 6
  %v1953 = vmul.f32 %v1950, %v1952
  %v1954 = vmul.f32 %v1951, %v1952
  %v1955 = vperm.slane %v22, 7
  %v1956 = vadd.f32 %v1953, %v1955
  %v1957 = vadd.f32 %v1954, %v1955
  %v1959 = vrot.slane %v1957, 7
  %vm1961 = vcmask 1040384
  %v1962 = vsel %vm1961, %v1956, %v1959
  %v1963 = vld [vmem:[%s2] sm:$0x3]
  %v1964 = vld [vmem:[%s3 + $0x2b0] sm:$0xf]
  %v1965 = vperm.slane %v23, 2
  %vm1966 = vcmask 31744
  %v1968 = vsel %vm1966, %v1963, 0
  %vm1970 = vcmask 1043456
  %v1972 = vsel %vm1970, %v1964, 0
  %1974 = vmatpush.msra.mxu0 0.0
  %1975 = vmatpush.msra.mxu0 0.0
  %1976 = vmatpush.msra.mxu0 0.0
  %1977 = vmatpush.msra.mxu0 0.0
  %1978 = vmatpush.msra.mxu0 0.0
  %1979 = vmatpush.msra.mxu0 0.0
  %1980 = vmatpush.msra.mxu0 0.0
  %1981 = vmatpush.msra.mxu0 0.0
  %1982 = vmatpush.msra.mxu0 0.0
  %1983 = vmatpush.msra.mxu0 0.0
  %1984 = vmatpush.msra.mxu0 0.0
  %1985 = vmatpush.msra.mxu0 0.0
  %1986 = vmatpush.msra.mxu0 0.0
  %1987 = vmatpush.msra.mxu0 0.0
  %1988 = vmatpush.msra.mxu0 0.0
  %1989 = vmatpush.msra.mxu0 %v1972
  %1990 = vmatmul.f32.gmra.mxu0 %v1968
  %v1991 = vpop.f32.mrf.mxu0
  %v1992 = vadd.f32 %v1965, %v1991
  %1993 = vdwg.mxu0
  %1995 = vrot.lane.b32.xlu0 %v1962, 32
  %v1996 = vpop.permute.xlu0 %1995
  %v1998 = vsel %vm88, %v1992, %v1996
  %v1999 = vld [vmem:[%s3 + $0x2b8] sm:$0xff]
  %v2000 = vld [vmem:[%s3 + $0x2c0] sm:$0xff]
  %v2001 = vld [vmem:[%s3 + $0x2c8] sm:$0xff]
  %v2002 = vld [vmem:[%s3 + $0x2d0] sm:$0xff]
  %v2003 = vld [vmem:[%s3 + $0x2d8] sm:$0xff]
  %v2004 = vld [vmem:[%s3 + $0x2e0] sm:$0xff]
  %v2005 = vld [vmem:[%s3 + $0x2e8] sm:$0xff]
  %v2006 = vld [vmem:[%s3 + $0x2f0] sm:$0xff]
  %v2007 = vperm.slane %v23, 3
  %v2009 = vsel %vm906, %v1998, 0
  %2011 = vmatpush.msra.mxu0 0.0
  %2012 = vmatpush.msra.mxu0 0.0
  %2013 = vmatpush.msra.mxu0 0.0
  %2014 = vmatpush.msra.mxu0 0.0
  %2015 = vmatpush.msra.mxu0 0.0
  %2016 = vmatpush.msra.mxu0 0.0
  %2017 = vmatpush.msra.mxu0 0.0
  %2018 = vmatpush.msra.mxu0 0.0
  %2019 = vmatpush.msra.mxu0 %v2006
  %2020 = vmatpush.msra.mxu0 %v2005
  %2021 = vmatpush.msra.mxu0 %v2004
  %2022 = vmatpush.msra.mxu0 %v2003
  %2023 = vmatpush.msra.mxu0 %v2002
  %2024 = vmatpush.msra.mxu0 %v2001
  %2025 = vmatpush.msra.mxu0 %v2000
  %2026 = vmatpush.msra.mxu0 %v1999
  %2027 = vmatmul.f32.gmra.mxu0 %v2009
  %v2028 = vpop.f32.mrf.mxu0
  %v2029 = vadd.f32 %v2007, %v2028
  %2030 = vdwg.mxu0
  %v2031 = vmax.f32 %v2029, 0.0
  %v2032 = vld [vmem:[%s3 + $0x2f8] sm:$0xff]
  %v2033 = vld [vmem:[%s3 + $0x300] sm:$0xff]
  %v2034 = vld [vmem:[%s3 + $0x308] sm:$0xff]
  %v2035 = vld [vmem:[%s3 + $0x310] sm:$0xff]
  %v2036 = vperm.slane %v23, 4
  %v2038 = vsel %vm88, %v2031, 0
  %2040 = vmatpush.msra.mxu0 0.0
  %2041 = vmatpush.msra.mxu0 0.0
  %2042 = vmatpush.msra.mxu0 0.0
  %2043 = vmatpush.msra.mxu0 0.0
  %2044 = vmatpush.msra.mxu0 0.0
  %2045 = vmatpush.msra.mxu0 0.0
  %2046 = vmatpush.msra.mxu0 0.0
  %2047 = vmatpush.msra.mxu0 0.0
  %2048 = vmatpush.msra.mxu0 0.0
  %2049 = vmatpush.msra.mxu0 0.0
  %2050 = vmatpush.msra.mxu0 0.0
  %2051 = vmatpush.msra.mxu0 0.0
  %2052 = vmatpush.msra.mxu0 %v2035
  %2053 = vmatpush.msra.mxu0 %v2034
  %2054 = vmatpush.msra.mxu0 %v2033
  %2055 = vmatpush.msra.mxu0 %v2032
  %2056 = vmatmul.f32.gmra.mxu0 %v2038
  %v2057 = vpop.f32.mrf.mxu0
  %v2058 = vadd.f32 %v2036, %v2057
  %2059 = vdwg.mxu0
  %v2060 = vmax.f32 %v2058, 0.0
  %v2061 = vld [vmem:[%s3 + $0x318] sm:$0xff]
  %v2062 = vld [vmem:[%s3 + $0x320] sm:$0xff]
  %v2063 = vperm.slane %v23, 5
  %v2065 = vsel %vm34, %v2060, 0
  %2067 = vmatpush.msra.mxu0 0.0
  %2068 = vmatpush.msra.mxu0 0.0
  %2069 = vmatpush.msra.mxu0 0.0
  %2070 = vmatpush.msra.mxu0 0.0
  %2071 = vmatpush.msra.mxu0 0.0
  %2072 = vmatpush.msra.mxu0 0.0
  %2073 = vmatpush.msra.mxu0 0.0
  %2074 = vmatpush.msra.mxu0 0.0
  %2075 = vmatpush.msra.mxu0 0.0
  %2076 = vmatpush.msra.mxu0 0.0
  %2077 = vmatpush.msra.mxu0 0.0
  %2078 = vmatpush.msra.mxu0 0.0
  %2079 = vmatpush.msra.mxu0 0.0
  %2080 = vmatpush.msra.mxu0 0.0
  %2081 = vmatpush.msra.mxu0 %v2062
  %2082 = vmatpush.msra.mxu0 %v2061
  %2083 = vmatmul.f32.gmra.mxu0 %v2065
  %v2084 = vpop.f32.mrf.mxu0
  %v2085 = vadd.f32 %v2063, %v2084
  %2086 = vdwg.mxu0
  %v2087 = vld [vmem:[%s3 + $0x328] sm:$0xff]
  %v2088 = vld [vmem:[%s3 + $0x330] sm:$0xff]
  %v2089 = vld [vmem:[%s3 + $0x338] sm:$0xff]
  %v2090 = vld [vmem:[%s3 + $0x340] sm:$0xff]
  %v2091 = vperm.slane %v23, 6
  %2092 = vmatpush.msra.mxu0 0.0
  %2093 = vmatpush.msra.mxu0 0.0
  %2094 = vmatpush.msra.mxu0 0.0
  %2095 = vmatpush.msra.mxu0 0.0
  %2096 = vmatpush.msra.mxu0 0.0
  %2097 = vmatpush.msra.mxu0 0.0
  %2098 = vmatpush.msra.mxu0 0.0
  %2099 = vmatpush.msra.mxu0 0.0
  %2100 = vmatpush.msra.mxu0 0.0
  %2101 = vmatpush.msra.mxu0 0.0
  %2102 = vmatpush.msra.mxu0 0.0
  %2103 = vmatpush.msra.mxu0 0.0
  %2104 = vmatpush.msra.mxu0 %v2090
  %2105 = vmatpush.msra.mxu0 %v2089
  %2106 = vmatpush.msra.mxu0 %v2088
  %2107 = vmatpush.msra.mxu0 %v2087
  %2108 = vmatmul.f32.gmra.mxu0 %v2038
  %v2109 = vpop.f32.mrf.mxu0
  %v2110 = vadd.f32 %v2091, %v2109
  %2111 = vdwg.mxu0
  %2113 = vrot.lane.b32.xlu0 %v2110, 1
  %v2114 = vpop.permute.xlu0 %2113
  %vm2116 = vcmask 7168
  %v2117 = vsel %vm2116, %v2085, %v2114
  %vm2118 = vcmask 56320
  %v2119 = vsel %vm2118, %v2117, 0.0
  %vm2120 = vcmask 58368
  %2121 = vst.msk [vmem:[%s5] sm:$0x3] %vm2120, %v2119
  // Predicated region
  $region22: #{hybrid_forward.1} parent=0 // pred_check
    _
  $region23: #{hybrid_forward.1} parent=0 // pred_check_branch
    %2123 = sbr.rel (0) target = $region25
  $region24: #{hybrid_forward.1} parent=0 // pred_region
    _
  $region25: #{hybrid_forward.1} parent=0 // pred_fallthru
    _
  // Predicated region
  $region26: #{hybrid_forward.1} parent=0 // pred_check
    _
  $region27: #{hybrid_forward.1} parent=0 // pred_check_branch
    %2125 = sbr.rel (0) target = $region29
  $region28: #{hybrid_forward.1} parent=0 // pred_region
    _
  $region29: #{hybrid_forward.1} parent=0 // pred_fallthru
    _

</llo_original>
